<compile_context>
chip_gen: v6e
topology: v6e:2x2x1
jax: 0.10.0
libtpu: 0.0.40
codegen_flags: <defaults>
</compile_context>

<pallas_src>
import functools

import jax
import jax.numpy as jnp
from jax.experimental import pallas as pl
from jax.experimental.pallas import tpu as pltpu


def _round_up(x, m):
    return (x + m - 1) // m * m


def _vmem_caps():
    """(tile-sizing budget, scoped vmem limit) in bytes, per TPU generation."""
    cap = 64 * 1024 * 1024  # conservative default (v7x per-TensorCore VMEM)
    try:
        info = pltpu.get_tpu_info()
        cap = int(getattr(info, "vmem_capacity_bytes", cap)) or cap
        cap = min(cap, 128 * 1024 * 1024)
    except Exception:
        pass
    return (cap * 5) // 8, (cap * 3) // 4


def gate_kernel(x_ref, hist_ref, wr_ref, wz_ref, brz_ref, wcx_ref, wch_ref, bc_ref, o_ref):
    # x_ref, hist_ref : [TN, E]  row tile of input / history features (native dtype)
    # wr_ref, wz_ref  : [2, E]   row 0 = weights on input part, row 1 = history part (native dtype)
    # brz_ref         : SMEM [2] (bias_r, bias_z), f32
    # wcx_ref, wch_ref: [E, E]   linear_c weight^T split: input part / h_t part (native dtype)
    # bc_ref          : [1, E]   linear_c bias, f32
    x_nat = x_ref[...]
    hist_nat = hist_ref[...]

    wr_x = wr_ref[0:1, :]
    wr_h = wr_ref[1:2, :]
    wz_x = wz_ref[0:1, :]
    wz_h = wz_ref[1:2, :]

    # linear_r / linear_z have a single output unit -> per-row dot product as
    # native-dtype elementwise mul (VPU) + f32-accumulated lane reduction (XLU).
    r_logit = jnp.sum(x_nat * wr_x + hist_nat * wr_h, axis=-1,
                      dtype=jnp.float32, keepdims=True) + brz_ref[0]
    z_logit = jnp.sum(x_nat * wz_x + hist_nat * wz_h, axis=-1,
                      dtype=jnp.float32, keepdims=True) + brz_ref[1]
    r = jax.nn.sigmoid(r_logit)                      # [TN, 1] f32
    z = jax.nn.sigmoid(z_logit)                      # [TN, 1] f32

    # h_t = history * r   (torch: matmul of [.,E,1] x [.,1,1] then squeeze)
    hist_f32 = hist_nat.astype(jnp.float32)
    h_t = (hist_f32 * r).astype(x_nat.dtype)         # native dtype for MXU

    # linear_c as two K=E MXU passes; weight refs fed straight into the dots.
    h_new = (
        jnp.dot(x_nat, wcx_ref[...], preferred_element_type=jnp.float32)
        + jnp.dot(h_t, wch_ref[...], preferred_element_type=jnp.float32)
        + bc_ref[...]
    )                                                # [TN, E] f32

    # out = h_new*z + hist*(1-z)  ==  hist + z*(h_new - hist)  (one fewer mul)
    o_ref[...] = (hist_f32 + z * (h_new - hist_f32)).astype(o_ref.dtype)


@functools.partial(jax.jit, static_argnames=("tn", "single_buffer_weights", "vmem_limit"))
def _gate_call(x, h, wr, wz, brz, wcx, wch, bc, *, tn, single_buffer_weights, vmem_limit):
    N, E = x.shape
    # Grid-invariant operands: constant index_map -> fetched once.  With
    # Buffered(1) they are also single-buffered (halves resident-weight VMEM).
    wmode = {"pipeline_mode": pl.Buffered(1)} if single_buffer_weights else {}
    grid = (pl.cdiv(N, tn),)
    return pl.pallas_call(
        gate_kernel,
        out_shape=jax.ShapeDtypeStruct((N, E), x.dtype),
        grid_spec=pltpu.PrefetchScalarGridSpec(
            num_scalar_prefetch=0,
            grid=grid,
            in_specs=[
                pl.BlockSpec((tn, E), lambda i: (i, 0)),             # x rows
                pl.BlockSpec((tn, E), lambda i: (i, 0)),             # history rows
                pl.BlockSpec((2, E), lambda i: (0, 0), **wmode),     # wr (resident)
                pl.BlockSpec((2, E), lambda i: (0, 0), **wmode),     # wz (resident)
                pl.BlockSpec(memory_space=pltpu.MemorySpace.SMEM),   # (bias_r, bias_z)
                pl.BlockSpec((E, E), lambda i: (0, 0), **wmode),     # linear_c W^T (input part)
                pl.BlockSpec((E, E), lambda i: (0, 0), **wmode),     # linear_c W^T (h_t part)
                pl.BlockSpec((1, E), lambda i: (0, 0), **wmode),     # linear_c bias
            ],
            out_specs=pl.BlockSpec((tn, E), lambda i: (i, 0)),
        ),
        compiler_params=pltpu.CompilerParams(
            dimension_semantics=("parallel",),
            vmem_limit_bytes=int(vmem_limit),
        ),
    )(x, h, wr, wz, brz, wcx, wch, bc)


# None = not probed yet; True/False = whether pl.Buffered(1) specs are usable.
_WEIGHT_SINGLE_BUFFER = None


def gate_forward(input_feature, history_feature, wr, wz, brz, wct, bc, tile_n=1024):
    """input_feature, history_feature: [T, B, E] -> output [T, B, E]."""
    global _WEIGHT_SINGLE_BUFFER
    T, B, E = input_feature.shape
    N = T * B
    dtype = input_feature.dtype

    x = input_feature.reshape(N, E)
    h = history_feature.reshape(N, E)

    # Split linear_c weight^T: rows 0:E act on input, rows E:2E act on h_t.
    # Keep MXU / gate-mul operands in the input's native dtype (bf16 stays bf16).
    wcx = wct[:E, :].astype(dtype)                   # [E, E]
    wch = wct[E:, :].astype(dtype)                   # [E, E]
    wr_n = wr.astype(dtype)                          # [2, E]
    wz_n = wz.astype(dtype)                          # [2, E]
    brz_f = brz.astype(jnp.float32)                  # [2]
    bc_f = bc.astype(jnp.float32)                    # [1, E]

    budget, vmem_limit = _vmem_caps()
    itemsize = jnp.dtype(dtype).itemsize
    w_itemsize = itemsize

    def tn_for(single_buffer):
        wbuf = 1 if single_buffer else 2
        weight_bytes = 2 * E * E * w_itemsize * wbuf + 8 * E * (itemsize + 4)  # wcx/wch + small params
        # Per-row bytes: (x + hist + out) x 2 pipeline buffers, plus kernel
        # temporaries (h_t in native dtype + ~4 f32 [tn, E] arrays).
        row_bytes = 6 * E * itemsize + E * itemsize + 16 * E
        avail = max(budget - weight_bytes, 0)
        cap = max(8, (avail // row_bytes) // 8 * 8)
        tn = min(int(tile_n), _round_up(N, 8), int(cap))
        # Keep at least 2 grid steps so ("parallel",) can use both v7x TensorCores.
        tn = min(tn, max(8, _round_up(-(-N // 2), 8)))
        return max(8, (tn // 8) * 8)

    args = (x, h, wr_n, wz_n, brz_f, wcx, wch, bc_f)

    if _WEIGHT_SINGLE_BUFFER is None:
        try:
            out = _gate_call(*args, tn=tn_for(True), single_buffer_weights=True,
                             vmem_limit=vmem_limit)
            out = jax.block_until_ready(out)
            _WEIGHT_SINGLE_BUFFER = True
        except Exception:
            # Older Pallas without pipeline_mode / Buffered(1): fall back to
            # the default double-buffered grid-invariant operands.
            _WEIGHT_SINGLE_BUFFER = False
            out = _gate_call(*args, tn=tn_for(False), single_buffer_weights=False,
                             vmem_limit=vmem_limit)
    else:
        sb = bool(_WEIGHT_SINGLE_BUFFER)
        out = _gate_call(*args, tn=tn_for(sb), single_buffer_weights=sb,
                         vmem_limit=vmem_limit)

    return out.reshape(T, B, E)


def gate_reference(input_feature, history_feature, wr, wz, brz, wct, bc):
    """Pure-JAX reference mirroring the PyTorch forward exactly."""
    h = jnp.concatenate([input_feature, history_feature], axis=-1)        # [T,B,2E]
    w_r = jnp.concatenate([wr[0], wr[1]])                                 # [2E]
    w_z = jnp.concatenate([wz[0], wz[1]])                                 # [2E]
    r = jax.nn.sigmoid(h @ w_r[:, None] + brz[0])                         # [T,B,1]
    z = jax.nn.sigmoid(h @ w_z[:, None] + brz[1])                         # [T,B,1]
    h_t = history_feature * r
    hc = jnp.concatenate([input_feature, h_t], axis=-1)                   # [T,B,2E]
    h_new = hc @ wct + bc[0]                                              # [T,B,E]
    return h_new * z + history_feature * (1.0 - z)


if __name__ == "__main__":
    T, B, E = 8, 2, 32
    key = jax.random.PRNGKey(0)
    k1, k2, k3, k4, k5, k6, k7 = jax.random.split(key, 7)

    # Deterministic synthetic parameters (shapes match nn.Linear(2E,1)x2 and nn.Linear(2E,E)).
    scale = 1.0 / jnp.sqrt(2.0 * E)
    wr = jax.random.normal(k1, (2, E), jnp.float32) * scale        # linear_r weight, split [x | hist]
    wz = jax.random.normal(k2, (2, E), jnp.float32) * scale        # linear_z weight, split [x | hist]
    brz = jax.random.normal(k3, (2,), jnp.float32) * scale         # (bias_r, bias_z)
    wct = jax.random.normal(k4, (2 * E, E), jnp.float32) * scale   # linear_c weight, transposed [2E, E]
    bc = jax.random.normal(k5, (1, E), jnp.float32) * scale        # linear_c bias

    input_feature = jax.random.normal(k6, (T, B, E), jnp.float32)
    history_feature = jax.random.normal(k7, (T, B, E), jnp.float32)

    out = gate_forward(input_feature, history_feature, wr, wz, brz, wct, bc)
    out = jax.block_until_ready(out)

    ref = gate_reference(input_feature, history_feature, wr, wz, brz, wct, bc)
    assert out.shape == (T, B, E)
    assert jnp.allclose(out, ref, atol=1e-5, rtol=1e-5), "mismatch vs reference"

    print("KERNEL_OK")
</pallas_src>

<mosaic_0001>
module attributes {stable_mosaic.version = 11 : i64} {
  func.func @gate_kernel(%arg0: i32, %arg1: memref<8x32xf32, #tpu.memory_space<vmem>>, %arg2: memref<8x32xf32, #tpu.memory_space<vmem>>, %arg3: memref<2x32xf32, #tpu.memory_space<vmem>>, %arg4: memref<2x32xf32, #tpu.memory_space<vmem>>, %arg5: memref<2xf32, #tpu.memory_space<smem>>, %arg6: memref<32x32xf32, #tpu.memory_space<vmem>>, %arg7: memref<32x32xf32, #tpu.memory_space<vmem>>, %arg8: memref<1x32xf32, #tpu.memory_space<vmem>>, %arg9: memref<8x32xf32, #tpu.memory_space<vmem>>) attributes {dimension_semantics = [#tpu.dimension_semantics<parallel>], iteration_bounds = array<i64: 2>, scalar_prefetch = 0 : i64, scratch_operands = 0 : i64, tpu.core_type = #tpu.core_type<tc>, window_params = [{transform_indices = @transform_0, window_bounds = array<i64: 8, 32>}, {transform_indices = @transform_1, window_bounds = array<i64: 8, 32>}, {pipeline_mode = #tpu.pipeline_mode<synchronous>, transform_indices = @transform_2, window_bounds = array<i64: 2, 32>}, {pipeline_mode = #tpu.pipeline_mode<synchronous>, transform_indices = @transform_3, window_bounds = array<i64: 2, 32>}, {transform_indices = @transform_4, window_bounds = array<i64: 2>}, {pipeline_mode = #tpu.pipeline_mode<synchronous>, transform_indices = @transform_5, window_bounds = array<i64: 32, 32>}, {pipeline_mode = #tpu.pipeline_mode<synchronous>, transform_indices = @transform_6, window_bounds = array<i64: 32, 32>}, {pipeline_mode = #tpu.pipeline_mode<synchronous>, transform_indices = @transform_7, window_bounds = array<i64: 1, 32>}, {transform_indices = @transform_8, window_bounds = array<i64: 8, 32>}]} {
    %c0 = arith.constant 0 : index
    %c0_0 = arith.constant 0 : index
    %0 = vector.load %arg1[%c0, %c0_0] : memref<8x32xf32, #tpu.memory_space<vmem>>, vector<8x32xf32>
    %c0_1 = arith.constant 0 : index
    %c0_2 = arith.constant 0 : index
    %1 = vector.load %arg2[%c0_1, %c0_2] : memref<8x32xf32, #tpu.memory_space<vmem>>, vector<8x32xf32>
    %c0_3 = arith.constant 0 : index
    %c0_4 = arith.constant 0 : index
    %2 = vector.load %arg3[%c0_3, %c0_4] : memref<2x32xf32, #tpu.memory_space<vmem>>, vector<1x32xf32>
    %c1 = arith.constant 1 : index
    %c0_5 = arith.constant 0 : index
    %3 = vector.load %arg3[%c1, %c0_5] : memref<2x32xf32, #tpu.memory_space<vmem>>, vector<1x32xf32>
    %c0_6 = arith.constant 0 : index
    %c0_7 = arith.constant 0 : index
    %4 = vector.load %arg4[%c0_6, %c0_7] : memref<2x32xf32, #tpu.memory_space<vmem>>, vector<1x32xf32>
    %c1_8 = arith.constant 1 : index
    %c0_9 = arith.constant 0 : index
    %5 = vector.load %arg4[%c1_8, %c0_9] : memref<2x32xf32, #tpu.memory_space<vmem>>, vector<1x32xf32>
    %6 = vector.broadcast %2 : vector<1x32xf32> to vector<8x32xf32>
    %7 = arith.mulf %0, %6 : vector<8x32xf32>
    %8 = vector.broadcast %3 : vector<1x32xf32> to vector<8x32xf32>
    %9 = arith.mulf %1, %8 : vector<8x32xf32>
    %10 = arith.addf %7, %9 : vector<8x32xf32>
    %cst = arith.constant dense<0.000000e+00> : vector<8xf32>
    %11 = vector.multi_reduction <add>, %10, %cst [1] : vector<8x32xf32> to vector<8xf32>
    %12 = vector.shape_cast %11 : vector<8xf32> to vector<8x1xf32>
    %c0_10 = arith.constant 0 : index
    %13 = memref.load %arg5[%c0_10] : memref<2xf32, #tpu.memory_space<smem>>
    %14 = vector.broadcast %13 : f32 to vector<8x1xf32>
    %15 = arith.addf %12, %14 : vector<8x1xf32>
    %16 = vector.broadcast %4 : vector<1x32xf32> to vector<8x32xf32>
    %17 = arith.mulf %0, %16 : vector<8x32xf32>
    %18 = vector.broadcast %5 : vector<1x32xf32> to vector<8x32xf32>
    %19 = arith.mulf %1, %18 : vector<8x32xf32>
    %20 = arith.addf %17, %19 : vector<8x32xf32>
    %cst_11 = arith.constant dense<0.000000e+00> : vector<8xf32>
    %21 = vector.multi_reduction <add>, %20, %cst_11 [1] : vector<8x32xf32> to vector<8xf32>
    %22 = vector.shape_cast %21 : vector<8xf32> to vector<8x1xf32>
    %c1_12 = arith.constant 1 : index
    %23 = memref.load %arg5[%c1_12] : memref<2xf32, #tpu.memory_space<smem>>
    %24 = vector.broadcast %23 : f32 to vector<8x1xf32>
    %25 = arith.addf %22, %24 : vector<8x1xf32>
    %26 = arith.negf %15 : vector<8x1xf32>
    %27 = math.exp %26 : vector<8x1xf32>
    %cst_13 = arith.constant 1.000000e+00 : f32
    %28 = vector.broadcast %cst_13 : f32 to vector<8x1xf32>
    %29 = arith.addf %28, %27 : vector<8x1xf32>
    %30 = arith.divf %28, %29 : vector<8x1xf32>
    %31 = arith.negf %25 : vector<8x1xf32>
    %32 = math.exp %31 : vector<8x1xf32>
    %cst_14 = arith.constant 1.000000e+00 : f32
    %33 = vector.broadcast %cst_14 : f32 to vector<8x1xf32>
    %34 = arith.addf %33, %32 : vector<8x1xf32>
    %35 = arith.divf %33, %34 : vector<8x1xf32>
    %36 = vector.broadcast %30 : vector<8x1xf32> to vector<8x32xf32>
    %37 = arith.mulf %1, %36 : vector<8x32xf32>
    %c0_15 = arith.constant 0 : index
    %c0_16 = arith.constant 0 : index
    %38 = vector.load %arg6[%c0_15, %c0_16] : memref<32x32xf32, #tpu.memory_space<vmem>>, vector<32x32xf32>
    %cst_17 = arith.constant dense<0.000000e+00> : vector<8x32xf32>
    %39 = tpu.matmul %0, %38, %cst_17 {dimension_numbers = #tpu.dot_dimension_numbers<[1], [0], [0], [1], [0, 0, 1, 1], [], []>} : vector<8x32xf32>, vector<32x32xf32>, vector<8x32xf32> -> vector<8x32xf32>
    %c0_18 = arith.constant 0 : index
    %c0_19 = arith.constant 0 : index
    %40 = vector.load %arg7[%c0_18, %c0_19] : memref<32x32xf32, #tpu.memory_space<vmem>>, vector<32x32xf32>
    %cst_20 = arith.constant dense<0.000000e+00> : vector<8x32xf32>
    %41 = tpu.matmul %37, %40, %cst_20 {dimension_numbers = #tpu.dot_dimension_numbers<[1], [0], [0], [1], [0, 0, 1, 1], [], []>} : vector<8x32xf32>, vector<32x32xf32>, vector<8x32xf32> -> vector<8x32xf32>
    %42 = arith.addf %39, %41 : vector<8x32xf32>
    %c0_21 = arith.constant 0 : index
    %c0_22 = arith.constant 0 : index
    %43 = vector.load %arg8[%c0_21, %c0_22] : memref<1x32xf32, #tpu.memory_space<vmem>>, vector<1x32xf32>
    %44 = vector.broadcast %43 : vector<1x32xf32> to vector<8x32xf32>
    %45 = arith.addf %42, %44 : vector<8x32xf32>
    %46 = arith.subf %45, %1 : vector<8x32xf32>
    %47 = vector.broadcast %35 : vector<8x1xf32> to vector<8x32xf32>
    %48 = arith.mulf %47, %46 : vector<8x32xf32>
    %49 = arith.addf %1, %48 : vector<8x32xf32>
    %c0_23 = arith.constant 0 : index
    %c0_24 = arith.constant 0 : index
    %50 = vector.load %arg9[%c0_23, %c0_24] : memref<8x32xf32, #tpu.memory_space<vmem>>, vector<8x32xf32>
    tpu.vector_store %arg9[%c0_23, %c0_24], %49 {strides = array<i32>} : memref<8x32xf32, #tpu.memory_space<vmem>>, vector<8x32xf32>,
    return
  }
  func.func @transform_0(%arg0: i32) -> (i32, i32) {
    %c0_i32 = arith.constant 0 : i32
    %c0_i32_0 = arith.constant 0 : i32
    return %arg0, %c0_i32 : i32, i32
  }
  func.func @transform_1(%arg0: i32) -> (i32, i32) {
    %c0_i32 = arith.constant 0 : i32
    %c0_i32_0 = arith.constant 0 : i32
    return %arg0, %c0_i32 : i32, i32
  }
  func.func @transform_2(%arg0: i32) -> (i32, i32) {
    %c0_i32 = arith.constant 0 : i32
    %c0_i32_0 = arith.constant 0 : i32
    %c0_i32_1 = arith.constant 0 : i32
    return %c0_i32, %c0_i32_0 : i32, i32
  }
  func.func @transform_3(%arg0: i32) -> (i32, i32) {
    %c0_i32 = arith.constant 0 : i32
    %c0_i32_0 = arith.constant 0 : i32
    %c0_i32_1 = arith.constant 0 : i32
    return %c0_i32, %c0_i32_0 : i32, i32
  }
  func.func @transform_4(%arg0: i32) -> i32 {
    %c0_i32 = arith.constant 0 : i32
    %c0_i32_0 = arith.constant 0 : i32
    return %c0_i32 : i32
  }
  func.func @transform_5(%arg0: i32) -> (i32, i32) {
    %c0_i32 = arith.constant 0 : i32
    %c0_i32_0 = arith.constant 0 : i32
    %c0_i32_1 = arith.constant 0 : i32
    return %c0_i32, %c0_i32_0 : i32, i32
  }
  func.func @transform_6(%arg0: i32) -> (i32, i32) {
    %c0_i32 = arith.constant 0 : i32
    %c0_i32_0 = arith.constant 0 : i32
    %c0_i32_1 = arith.constant 0 : i32
    return %c0_i32, %c0_i32_0 : i32, i32
  }
  func.func @transform_7(%arg0: i32) -> (i32, i32) {
    %c0_i32 = arith.constant 0 : i32
    %c0_i32_0 = arith.constant 0 : i32
    %c0_i32_1 = arith.constant 0 : i32
    return %c0_i32, %c0_i32_0 : i32, i32
  }
  func.func @transform_8(%arg0: i32) -> (i32, i32) {
    %c0_i32 = arith.constant 0 : i32
    %c0_i32_0 = arith.constant 0 : i32
    return %arg0, %c0_i32 : i32, i32
  }
}

module attributes {stable_mosaic.version = 11 : i64} {
  func.func @gate_kernel(%arg0: i32, %arg1: memref<8x32xf32, #tpu.memory_space<vmem>>, %arg2: memref<8x32xf32, #tpu.memory_space<vmem>>, %arg3: memref<2x32xf32, #tpu.memory_space<vmem>>, %arg4: memref<2x32xf32, #tpu.memory_space<vmem>>, %arg5: memref<2xf32, #tpu.memory_space<smem>>, %arg6: memref<32x32xf32, #tpu.memory_space<vmem>>, %arg7: memref<32x32xf32, #tpu.memory_space<vmem>>, %arg8: memref<1x32xf32, #tpu.memory_space<vmem>>, %arg9: memref<8x32xf32, #tpu.memory_space<vmem>>) attributes {dimension_semantics = [#tpu.dimension_semantics<parallel>], iteration_bounds = array<i64: 2>, scalar_prefetch = 0 : i64, scratch_operands = 0 : i64, tpu.core_type = #tpu.core_type<tc>, window_params = [{transform_indices = @transform_0, window_bounds = array<i64: 8, 32>}, {transform_indices = @transform_1, window_bounds = array<i64: 8, 32>}, {pipeline_mode = #tpu.pipeline_mode<synchronous>, transform_indices = @transform_2, window_bounds = array<i64: 2, 32>}, {pipeline_mode = #tpu.pipeline_mode<synchronous>, transform_indices = @transform_3, window_bounds = array<i64: 2, 32>}, {transform_indices = @transform_4, window_bounds = array<i64: 2>}, {pipeline_mode = #tpu.pipeline_mode<synchronous>, transform_indices = @transform_5, window_bounds = array<i64: 32, 32>}, {pipeline_mode = #tpu.pipeline_mode<synchronous>, transform_indices = @transform_6, window_bounds = array<i64: 32, 32>}, {pipeline_mode = #tpu.pipeline_mode<synchronous>, transform_indices = @transform_7, window_bounds = array<i64: 1, 32>}, {transform_indices = @transform_8, window_bounds = array<i64: 8, 32>}]} {
    %c0 = arith.constant 0 : index
    %c0_0 = arith.constant 0 : index
    %0 = vector.load %arg1[%c0, %c0_0] : memref<8x32xf32, #tpu.memory_space<vmem>>, vector<8x32xf32>
    %c0_1 = arith.constant 0 : index
    %c0_2 = arith.constant 0 : index
    %1 = vector.load %arg2[%c0_1, %c0_2] : memref<8x32xf32, #tpu.memory_space<vmem>>, vector<8x32xf32>
    %c0_3 = arith.constant 0 : index
    %c0_4 = arith.constant 0 : index
    %2 = vector.load %arg3[%c0_3, %c0_4] : memref<2x32xf32, #tpu.memory_space<vmem>>, vector<1x32xf32>
    %c1 = arith.constant 1 : index
    %c0_5 = arith.constant 0 : index
    %3 = vector.load %arg3[%c1, %c0_5] : memref<2x32xf32, #tpu.memory_space<vmem>>, vector<1x32xf32>
    %c0_6 = arith.constant 0 : index
    %c0_7 = arith.constant 0 : index
    %4 = vector.load %arg4[%c0_6, %c0_7] : memref<2x32xf32, #tpu.memory_space<vmem>>, vector<1x32xf32>
    %c1_8 = arith.constant 1 : index
    %c0_9 = arith.constant 0 : index
    %5 = vector.load %arg4[%c1_8, %c0_9] : memref<2x32xf32, #tpu.memory_space<vmem>>, vector<1x32xf32>
    %6 = vector.broadcast %2 : vector<1x32xf32> to vector<8x32xf32>
    %7 = arith.mulf %0, %6 : vector<8x32xf32>
    %8 = vector.broadcast %3 : vector<1x32xf32> to vector<8x32xf32>
    %9 = arith.mulf %1, %8 : vector<8x32xf32>
    %10 = arith.addf %7, %9 : vector<8x32xf32>
    %cst = arith.constant dense<0.000000e+00> : vector<8xf32>
    %11 = vector.multi_reduction <add>, %10, %cst [1] : vector<8x32xf32> to vector<8xf32>
    %12 = vector.shape_cast %11 : vector<8xf32> to vector<8x1xf32>
    %c0_10 = arith.constant 0 : index
    %13 = memref.load %arg5[%c0_10] : memref<2xf32, #tpu.memory_space<smem>>
    %14 = vector.broadcast %13 : f32 to vector<8x1xf32>
    %15 = arith.addf %12, %14 : vector<8x1xf32>
    %16 = vector.broadcast %4 : vector<1x32xf32> to vector<8x32xf32>
    %17 = arith.mulf %0, %16 : vector<8x32xf32>
    %18 = vector.broadcast %5 : vector<1x32xf32> to vector<8x32xf32>
    %19 = arith.mulf %1, %18 : vector<8x32xf32>
    %20 = arith.addf %17, %19 : vector<8x32xf32>
    %cst_11 = arith.constant dense<0.000000e+00> : vector<8xf32>
    %21 = vector.multi_reduction <add>, %20, %cst_11 [1] : vector<8x32xf32> to vector<8xf32>
    %22 = vector.shape_cast %21 : vector<8xf32> to vector<8x1xf32>
    %c1_12 = arith.constant 1 : index
    %23 = memref.load %arg5[%c1_12] : memref<2xf32, #tpu.memory_space<smem>>
    %24 = vector.broadcast %23 : f32 to vector<8x1xf32>
    %25 = arith.addf %22, %24 : vector<8x1xf32>
    %26 = arith.negf %15 : vector<8x1xf32>
    %27 = math.exp %26 : vector<8x1xf32>
    %cst_13 = arith.constant 1.000000e+00 : f32
    %28 = vector.broadcast %cst_13 : f32 to vector<8x1xf32>
    %29 = arith.addf %28, %27 : vector<8x1xf32>
    %30 = arith.divf %28, %29 : vector<8x1xf32>
    %31 = arith.negf %25 : vector<8x1xf32>
    %32 = math.exp %31 : vector<8x1xf32>
    %cst_14 = arith.constant 1.000000e+00 : f32
    %33 = vector.broadcast %cst_14 : f32 to vector<8x1xf32>
    %34 = arith.addf %33, %32 : vector<8x1xf32>
    %35 = arith.divf %33, %34 : vector<8x1xf32>
    %36 = vector.broadcast %30 : vector<8x1xf32> to vector<8x32xf32>
    %37 = arith.mulf %1, %36 : vector<8x32xf32>
    %c0_15 = arith.constant 0 : index
    %c0_16 = arith.constant 0 : index
    %38 = vector.load %arg6[%c0_15, %c0_16] : memref<32x32xf32, #tpu.memory_space<vmem>>, vector<32x32xf32>
    %cst_17 = arith.constant dense<0.000000e+00> : vector<8x32xf32>
    %39 = tpu.matmul %0, %38, %cst_17 {dimension_numbers = #tpu.dot_dimension_numbers<[1], [0], [0], [1], [0, 0, 1, 1], [], []>} : vector<8x32xf32>, vector<32x32xf32>, vector<8x32xf32> -> vector<8x32xf32>
    %c0_18 = arith.constant 0 : index
    %c0_19 = arith.constant 0 : index
    %40 = vector.load %arg7[%c0_18, %c0_19] : memref<32x32xf32, #tpu.memory_space<vmem>>, vector<32x32xf32>
    %cst_20 = arith.constant dense<0.000000e+00> : vector<8x32xf32>
    %41 = tpu.matmul %37, %40, %cst_20 {dimension_numbers = #tpu.dot_dimension_numbers<[1], [0], [0], [1], [0, 0, 1, 1], [], []>} : vector<8x32xf32>, vector<32x32xf32>, vector<8x32xf32> -> vector<8x32xf32>
    %42 = arith.addf %39, %41 : vector<8x32xf32>
    %c0_21 = arith.constant 0 : index
    %c0_22 = arith.constant 0 : index
    %43 = vector.load %arg8[%c0_21, %c0_22] : memref<1x32xf32, #tpu.memory_space<vmem>>, vector<1x32xf32>
    %44 = vector.broadcast %43 : vector<1x32xf32> to vector<8x32xf32>
    %45 = arith.addf %42, %44 : vector<8x32xf32>
    %46 = arith.subf %45, %1 : vector<8x32xf32>
    %47 = vector.broadcast %35 : vector<8x1xf32> to vector<8x32xf32>
    %48 = arith.mulf %47, %46 : vector<8x32xf32>
    %49 = arith.addf %1, %48 : vector<8x32xf32>
    %c0_23 = arith.constant 0 : index
    %c0_24 = arith.constant 0 : index
    %50 = vector.load %arg9[%c0_23, %c0_24] : memref<8x32xf32, #tpu.memory_space<vmem>>, vector<8x32xf32>
    tpu.vector_store %arg9[%c0_23, %c0_24], %49 {strides = array<i32>} : memref<8x32xf32, #tpu.memory_space<vmem>>, vector<8x32xf32>,
    return
  }
  func.func @transform_0(%arg0: i32) -> (i32, i32) {
    %c0_i32 = arith.constant 0 : i32
    %c0_i32_0 = arith.constant 0 : i32
    return %arg0, %c0_i32 : i32, i32
  }
  func.func @transform_1(%arg0: i32) -> (i32, i32) {
    %c0_i32 = arith.constant 0 : i32
    %c0_i32_0 = arith.constant 0 : i32
    return %arg0, %c0_i32 : i32, i32
  }
  func.func @transform_2(%arg0: i32) -> (i32, i32) {
    %c0_i32 = arith.constant 0 : i32
    %c0_i32_0 = arith.constant 0 : i32
    %c0_i32_1 = arith.constant 0 : i32
    return %c0_i32, %c0_i32_0 : i32, i32
  }
  func.func @transform_3(%arg0: i32) -> (i32, i32) {
    %c0_i32 = arith.constant 0 : i32
    %c0_i32_0 = arith.constant 0 : i32
    %c0_i32_1 = arith.constant 0 : i32
    return %c0_i32, %c0_i32_0 : i32, i32
  }
  func.func @transform_4(%arg0: i32) -> i32 {
    %c0_i32 = arith.constant 0 : i32
    %c0_i32_0 = arith.constant 0 : i32
    return %c0_i32 : i32
  }
  func.func @transform_5(%arg0: i32) -> (i32, i32) {
    %c0_i32 = arith.constant 0 : i32
    %c0_i32_0 = arith.constant 0 : i32
    %c0_i32_1 = arith.constant 0 : i32
    return %c0_i32, %c0_i32_0 : i32, i32
  }
  func.func @transform_6(%arg0: i32) -> (i32, i32) {
    %c0_i32 = arith.constant 0 : i32
    %c0_i32_0 = arith.constant 0 : i32
    %c0_i32_1 = arith.constant 0 : i32
    return %c0_i32, %c0_i32_0 : i32, i32
  }
  func.func @transform_7(%arg0: i32) -> (i32, i32) {
    %c0_i32 = arith.constant 0 : i32
    %c0_i32_0 = arith.constant 0 : i32
    %c0_i32_1 = arith.constant 0 : i32
    return %c0_i32, %c0_i32_0 : i32, i32
  }
  func.func @transform_8(%arg0: i32) -> (i32, i32) {
    %c0_i32 = arith.constant 0 : i32
    %c0_i32_0 = arith.constant 0 : i32
    return %arg0, %c0_i32 : i32, i32
  }
}

</mosaic_0001>

<llo_original>
// kernel: _gate_call.1
$region0: #{_gate_call.1}
  #allocation0 [shape = 'u32[]', space=smem, size = 0x4, offset = 0x4, fixed_abs, tag = 'smem constant byte address 0x4 - core index']
  #allocation1 [shape = 'u32[144,128]{1,0:T(1,128)}', space=vmem, size = 0x12000, scoped, tag = 'internal scratch']
  %s0 = inlined_call_operand.hbm [shape: f32[16,32], index: 0, kind: input, shape index: {}]
  %s1 = inlined_call_operand.hbm [shape: f32[16,32], index: 1, kind: input, shape index: {}]
  %s2 = inlined_call_operand.vmem [shape: f32[2,32], index: 2, kind: input, shape index: {}]
  %s3 = inlined_call_operand.vmem [shape: f32[2,32], index: 3, kind: input, shape index: {}]
  %s4 = inlined_call_operand.vmem [shape: f32[2], index: 4, kind: input, shape index: {}]
  %s5 = inlined_call_operand.hbm [shape: f32[32,32], index: 5, kind: input, shape index: {}]
  %s6 = inlined_call_operand.hbm [shape: f32[32,32], index: 6, kind: input, shape index: {}]
  %s7 = inlined_call_operand.vmem [shape: f32[1,32], index: 7, kind: input, shape index: {}]
  %s8 = inlined_call_operand.hbm [shape: f32[16,32], index: 8, kind: output, shape index: {}]
  %s9 = sld [smem:[#allocation0]]
  $region85: #{_gate_call.1} parent=0
    _
  %s11 = ssub.s32 1, %s9
  %s12 = scalar_select 0, %s11, %s9
  $region1: #{_gate_call.1} parent=0
    #allocation2 [shape = 'u8[8192]{0}', space=vmem, size = 0x2000, scoped, tag = 'input window, operand 0']
    #allocation3 [shape = 's32[2]{0}', space=sflag, size = 0x8, scoped, tag = 'scoped memory for _gate_call.1']
    #allocation4 [shape = 's32[2]{0}', space=sflag, size = 0x8, scoped, tag = 'scoped memory for _gate_call.1']
    #allocation5 [shape = 's32[2]{0}', space=sflag, size = 0x8, scoped, tag = 'scoped memory for _gate_call.1']
    #allocation6 [shape = 'u8[8192]{0}', space=vmem, size = 0x2000, scoped, tag = 'input window, operand 1']
    #allocation7 [shape = 's32[2]{0}', space=sflag, size = 0x8, scoped, tag = 'scoped memory for _gate_call.1']
    #allocation8 [shape = 'u8[512]{0}', space=smem, size = 0x200, scoped, tag = 'input window, operand 4, single buffered']
    #allocation9 [shape = 'u8[16384]{0}', space=vmem, size = 0x4000, scoped, tag = 'input window, operand 5, single buffered']
    #allocation10 [shape = 'u8[16384]{0}', space=vmem, size = 0x4000, scoped, tag = 'input window, operand 6, single buffered']
    #allocation11 [shape = 's32[1]{0}', space=sflag, size = 0x4, scoped, tag = 'scoped memory for _gate_call.1']
    #allocation12 [shape = 'u8[8192]{0}', space=vmem, size = 0x2000, scoped, tag = 'output window, operand 0']
    %13 = vsyncpa [#allocation3], 0
    %s14 = scalar_lea.sflag [#allocation3], 1
    %15 = vsyncpa %s14, 0
    %16 = vsyncpa [#allocation7], 0
    %s17 = scalar_lea.sflag [#allocation7], 1
    %18 = vsyncpa %s17, 0
    %19 = vsyncpa [#allocation5], 0
    %20 = vsyncpa [#allocation11], 0
    %21 = vsyncpa [#allocation4], 0
    %s22 = scalar_lea.sflag [#allocation4], 1
    %23 = vsyncpa %s22, 0
    loop: start=0, step=1, limit=4
    $region2: #{_gate_call.1} parent=1 // loop_pre_header
      _
    $region3: #{_gate_call.1} parent=1 // loop_header
      %s25 = sphi 0, %s29
      %p26 = scmp.ge.s32.totalorder %s25, 4
      %s35 = sphi 0, %s37
      %s38 = sphi 0, %s35
      %s39 = sphi 0, %s38
      %s55 = sphi 0, %s39
      %s61 = sphi 0, %s63
      %s64 = sphi 0, %s61
      %s65 = sphi 0, %s64
      %s81 = sphi 0, %s65
      %s85 = sphi 0, %s85
      %s87 = sphi 0, %s85
      %s88 = sphi 0, %s87
      %s102 = sphi 0, %s88
      %s106 = sphi 0, %s106
      %s108 = sphi 0, %s106
      %s109 = sphi 0, %s108
      %s123 = sphi 0, %s109
      %s127 = sphi 0, %s127
      %s129 = sphi 0, %s127
      %s130 = sphi 0, %s129
      %s144 = sphi 0, %s130
      %s148 = sphi 0, %s148
      %s150 = sphi 0, %s148
      %s151 = sphi 0, %s150
      %s165 = sphi 0, %s151
      %s169 = sphi 0, %s169
      %s171 = sphi 0, %s169
      %s172 = sphi 0, %s171
      %s186 = sphi 0, %s172
      %s190 = sphi 0, %s190
      %s192 = sphi 0, %s190
      %s193 = sphi 0, %s192
      %s207 = sphi 0, %s193
      %s213 = sphi 0, %s215
      %s216 = sphi 0, %s213
      %s217 = sphi 0, %s216
      %s233 = sphi 0, %s217
    $region4: #{_gate_call.1} parent=1 // loop_header_branch
      %28 = sbr.rel (%p26) target = $region8
    $region5: #{_gate_call.1} parent=1 // loop_body
      %s30 = ssub.s32 %s25, 1
      %s31 = ssub.s32 %s25, 2
      %s32 = sadd.s32 %s25, 1
      %s33 = ssub.s32 %s25, %s32
      %p34 = scmp.eq.s32.totalorder %s33, 0
      %s36 = sadd.s32 %s35, 1
      %s37 = scalar_select %p34, %s35, %s36
      %p40 = pneg %p34
      %p41 = scmp.eq.s32.totalorder %s25, 1
      %p42 = por %p40, %p41
      %p43 = scmp.ne.s32.totalorder %s35, %s38
      %p44 = scmp.eq.s32.totalorder %s25, 0
      %p45 = por %p43, %p44
      %p46 = scmp.ne.s32.totalorder %s35, %s38
      %p47 = scmp.eq.s32.totalorder %s30, 1
      %p48 = por %p46, %p47
      %p49 = scmp.ne.s32.totalorder %s38, %s39
      %p50 = scmp.eq.s32.totalorder %s30, 0
      %p51 = por %p49, %p50
      %p52 = scmp.ne.s32.totalorder %s38, %s39
      %p53 = scmp.eq.s32.totalorder %s31, 1
      %p54 = por %p52, %p53
      %p56 = scmp.ne.s32.totalorder %s39, %s55
      %p57 = scmp.eq.s32.totalorder %s31, 0
      %p58 = por %p56, %p57
      %s59 = ssub.s32 %s25, %s32
      %p60 = scmp.eq.s32.totalorder %s59, 0
      %s62 = sadd.s32 %s61, 1
      %s63 = scalar_select %p60, %s61, %s62
      %p66 = pneg %p60
      %p67 = scmp.eq.s32.totalorder %s25, 1
      %p68 = por %p66, %p67
      %p69 = scmp.ne.s32.totalorder %s61, %s64
      %p70 = scmp.eq.s32.totalorder %s25, 0
      %p71 = por %p69, %p70
      %p72 = scmp.ne.s32.totalorder %s61, %s64
      %p73 = scmp.eq.s32.totalorder %s30, 1
      %p74 = por %p72, %p73
      %p75 = scmp.ne.s32.totalorder %s64, %s65
      %p76 = scmp.eq.s32.totalorder %s30, 0
      %p77 = por %p75, %p76
      %p78 = scmp.ne.s32.totalorder %s64, %s65
      %p79 = scmp.eq.s32.totalorder %s31, 1
      %p80 = por %p78, %p79
      %p82 = scmp.ne.s32.totalorder %s65, %s81
      %p83 = scmp.eq.s32.totalorder %s31, 0
      %p84 = por %p82, %p83
      %s86 = sadd.s32 %s85, 1
      %p89 = scmp.eq.s32.totalorder %s25, 1
      %p90 = scmp.ne.s32.totalorder %s85, %s87
      %p91 = scmp.eq.s32.totalorder %s25, 0
      %p92 = por %p90, %p91
      %p93 = scmp.ne.s32.totalorder %s85, %s87
      %p94 = scmp.eq.s32.totalorder %s30, 1
      %p95 = por %p93, %p94
      %p96 = scmp.ne.s32.totalorder %s87, %s88
      %p97 = scmp.eq.s32.totalorder %s30, 0
      %p98 = por %p96, %p97
      %p99 = scmp.ne.s32.totalorder %s87, %s88
      %p100 = scmp.eq.s32.totalorder %s31, 1
      %p101 = por %p99, %p100
      %p103 = scmp.ne.s32.totalorder %s88, %s102
      %p104 = scmp.eq.s32.totalorder %s31, 0
      %p105 = por %p103, %p104
      %s107 = sadd.s32 %s106, 1
      %p110 = scmp.eq.s32.totalorder %s25, 1
      %p111 = scmp.ne.s32.totalorder %s106, %s108
      %p112 = scmp.eq.s32.totalorder %s25, 0
      %p113 = por %p111, %p112
      %p114 = scmp.ne.s32.totalorder %s106, %s108
      %p115 = scmp.eq.s32.totalorder %s30, 1
      %p116 = por %p114, %p115
      %p117 = scmp.ne.s32.totalorder %s108, %s109
      %p118 = scmp.eq.s32.totalorder %s30, 0
      %p119 = por %p117, %p118
      %p120 = scmp.ne.s32.totalorder %s108, %s109
      %p121 = scmp.eq.s32.totalorder %s31, 1
      %p122 = por %p120, %p121
      %p124 = scmp.ne.s32.totalorder %s109, %s123
      %p125 = scmp.eq.s32.totalorder %s31, 0
      %p126 = por %p124, %p125
      %s128 = sadd.s32 %s127, 1
      %p131 = scmp.eq.s32.totalorder %s25, 1
      %p132 = scmp.ne.s32.totalorder %s127, %s129
      %p133 = scmp.eq.s32.totalorder %s25, 0
      %p134 = por %p132, %p133
      %p135 = scmp.ne.s32.totalorder %s127, %s129
      %p136 = scmp.eq.s32.totalorder %s30, 1
      %p137 = por %p135, %p136
      %p138 = scmp.ne.s32.totalorder %s129, %s130
      %p139 = scmp.eq.s32.totalorder %s30, 0
      %p140 = por %p138, %p139
      %p141 = scmp.ne.s32.totalorder %s129, %s130
      %p142 = scmp.eq.s32.totalorder %s31, 1
      %p143 = por %p141, %p142
      %p145 = scmp.ne.s32.totalorder %s130, %s144
      %p146 = scmp.eq.s32.totalorder %s31, 0
      %p147 = por %p145, %p146
      %s149 = sadd.s32 %s148, 1
      %p152 = scmp.eq.s32.totalorder %s25, 1
      %p153 = scmp.ne.s32.totalorder %s148, %s150
      %p154 = scmp.eq.s32.totalorder %s25, 0
      %p155 = por %p153, %p154
      %p156 = scmp.ne.s32.totalorder %s148, %s150
      %p157 = scmp.eq.s32.totalorder %s30, 1
      %p158 = por %p156, %p157
      %p159 = scmp.ne.s32.totalorder %s150, %s151
      %p160 = scmp.eq.s32.totalorder %s30, 0
      %p161 = por %p159, %p160
      %p162 = scmp.ne.s32.totalorder %s150, %s151
      %p163 = scmp.eq.s32.totalorder %s31, 1
      %p164 = por %p162, %p163
      %p166 = scmp.ne.s32.totalorder %s151, %s165
      %p167 = scmp.eq.s32.totalorder %s31, 0
      %p168 = por %p166, %p167
      %s170 = sadd.s32 %s169, 1
      %p173 = scmp.eq.s32.totalorder %s25, 1
      %p174 = scmp.ne.s32.totalorder %s169, %s171
      %p175 = scmp.eq.s32.totalorder %s25, 0
      %p176 = por %p174, %p175
      %p177 = scmp.ne.s32.totalorder %s169, %s171
      %p178 = scmp.eq.s32.totalorder %s30, 1
      %p179 = por %p177, %p178
      %p180 = scmp.ne.s32.totalorder %s171, %s172
      %p181 = scmp.eq.s32.totalorder %s30, 0
      %p182 = por %p180, %p181
      %p183 = scmp.ne.s32.totalorder %s171, %s172
      %p184 = scmp.eq.s32.totalorder %s31, 1
      %p185 = por %p183, %p184
      %p187 = scmp.ne.s32.totalorder %s172, %s186
      %p188 = scmp.eq.s32.totalorder %s31, 0
      %p189 = por %p187, %p188
      %s191 = sadd.s32 %s190, 1
      %p194 = scmp.eq.s32.totalorder %s25, 1
      %p195 = scmp.ne.s32.totalorder %s190, %s192
      %p196 = scmp.eq.s32.totalorder %s25, 0
      %p197 = por %p195, %p196
      %p198 = scmp.ne.s32.totalorder %s190, %s192
      %p199 = scmp.eq.s32.totalorder %s30, 1
      %p200 = por %p198, %p199
      %p201 = scmp.ne.s32.totalorder %s192, %s193
      %p202 = scmp.eq.s32.totalorder %s30, 0
      %p203 = por %p201, %p202
      %p204 = scmp.ne.s32.totalorder %s192, %s193
      %p205 = scmp.eq.s32.totalorder %s31, 1
      %p206 = por %p204, %p205
      %p208 = scmp.ne.s32.totalorder %s193, %s207
      %p209 = scmp.eq.s32.totalorder %s31, 0
      %p210 = por %p208, %p209
      %s211 = ssub.s32 %s25, %s32
      %p212 = scmp.eq.s32.totalorder %s211, 0
      %s214 = sadd.s32 %s213, 1
      %s215 = scalar_select %p212, %s213, %s214
      %p218 = pneg %p212
      %p219 = scmp.eq.s32.totalorder %s25, 1
      %p220 = por %p218, %p219
      %p221 = scmp.ne.s32.totalorder %s213, %s216
      %p222 = scmp.eq.s32.totalorder %s25, 0
      %p223 = por %p221, %p222
      %p224 = scmp.ne.s32.totalorder %s213, %s216
      %p225 = scmp.eq.s32.totalorder %s30, 1
      %p226 = por %p224, %p225
      %p227 = scmp.ne.s32.totalorder %s216, %s217
      %p228 = scmp.eq.s32.totalorder %s30, 0
      %p229 = por %p227, %p228
      %p230 = scmp.ne.s32.totalorder %s216, %s217
      %p231 = scmp.eq.s32.totalorder %s31, 1
      %p232 = por %p230, %p231
      %p234 = scmp.ne.s32.totalorder %s217, %s233
      %p235 = scmp.eq.s32.totalorder %s31, 0
      %p236 = por %p234, %p235
      %p237 = scmp.le.s32.totalorder 1, %s25
      %p238 = scmp.lt.s32.totalorder %s25, 3
      %p239 = pnand %p237, %p238
      %p240 = pneg %p239
      // Predicated region
      $region9: #{_gate_call.1} parent=5 // pred_check
        _
      $region10: #{_gate_call.1} parent=5 // pred_check_branch
        %242 = sbr.rel (%p239) target = $region12
      $region11: #{_gate_call.1} parent=5 // pred_region
        %s243 = ssub.s32 %s25, 1
        // Predicated region
        $region13: #{_gate_call.1} parent=11 // pred_check
          %p244 = pneg %p98
        $region14: #{_gate_call.1} parent=11 // pred_check_branch
          %246 = sbr.rel (%p244) target = $region16
        $region15: #{_gate_call.1} parent=11 // pred_region
          _
        $region16: #{_gate_call.1} parent=11 // pred_fallthru
          _
        // Predicated region
        $region17: #{_gate_call.1} parent=11 // pred_check
          %p247 = pneg %p119
        $region18: #{_gate_call.1} parent=11 // pred_check_branch
          %249 = sbr.rel (%p247) target = $region20
        $region19: #{_gate_call.1} parent=11 // pred_region
          _
        $region20: #{_gate_call.1} parent=11 // pred_fallthru
          _
        // Predicated region
        $region21: #{_gate_call.1} parent=11 // pred_check
          %p250 = pneg %p140
        $region22: #{_gate_call.1} parent=11 // pred_check_branch
          %252 = sbr.rel (%p250) target = $region24
        $region23: #{_gate_call.1} parent=11 // pred_region
          %s254 = ssub.s32 16, 16
          %255 = vsyncadd [#allocation5], %s254
          %s257 = sshll.u32 %s4, 4
          %s258 = int_to_ptr.vmem [resolvable:$true] %s257
          %260 = dma.vmem_to_smem %s258, 16, [#allocation8], [#allocation5]
        $region24: #{_gate_call.1} parent=11 // pred_fallthru
          _
        // Predicated region
        $region25: #{_gate_call.1} parent=11 // pred_check
          %p261 = pneg %p161
        $region26: #{_gate_call.1} parent=11 // pred_check_branch
          %263 = sbr.rel (%p261) target = $region28
        $region27: #{_gate_call.1} parent=11 // pred_region
          %s265 = ssub.s32 512, 512
          %266 = vsyncadd [#allocation7], %s265
          %s267 = sshll.u32 [#allocation9], 4
          %s268 = int_to_ptr.vmem [resolvable:$true] %s267
          %273 = dma.hbm_to_vmem [thread:$0]  %s5, 512, %s268, [#allocation7], 128, 128, 8
        $region28: #{_gate_call.1} parent=11 // pred_fallthru
          _
        // Predicated region
        $region29: #{_gate_call.1} parent=11 // pred_check
          %p274 = pneg %p182
        $region30: #{_gate_call.1} parent=11 // pred_check_branch
          %276 = sbr.rel (%p274) target = $region32
        $region31: #{_gate_call.1} parent=11 // pred_region
          %s278 = ssub.s32 512, 512
          %279 = vsyncadd [#allocation11], %s278
          %s280 = sshll.u32 [#allocation10], 4
          %s281 = int_to_ptr.vmem [resolvable:$true] %s280
          %286 = dma.hbm_to_vmem [thread:$0]  %s6, 512, %s281, [#allocation11], 128, 128, 8
        $region32: #{_gate_call.1} parent=11 // pred_fallthru
          _
        // Predicated region
        $region33: #{_gate_call.1} parent=11 // pred_check
          %p287 = pneg %p203
        $region34: #{_gate_call.1} parent=11 // pred_check_branch
          %289 = sbr.rel (%p287) target = $region36
        $region35: #{_gate_call.1} parent=11 // pred_region
          _
        $region36: #{_gate_call.1} parent=11 // pred_fallthru
          _
      $region12: #{_gate_call.1} parent=5 // pred_fallthru
        _
      %p290 = scmp.lt.s32.totalorder %s25, 2
      // Predicated region
      $region37: #{_gate_call.1} parent=5 // pred_check
        %p291 = pneg %p290
      $region38: #{_gate_call.1} parent=5 // pred_check_branch
        %293 = sbr.rel (%p291) target = $region40
      $region39: #{_gate_call.1} parent=5 // pred_region
        // Predicated region
        $region41: #{_gate_call.1} parent=39 // pred_check
          %p294 = pneg %p45
        $region42: #{_gate_call.1} parent=39 // pred_check_branch
          %296 = sbr.rel (%p294) target = $region44
        $region43: #{_gate_call.1} parent=39 // pred_region
          %s297 = sand.u32 %s35, 1
          %s298 = scalar_lea.sflag [#allocation3], %s297
          %s299 = sand.u32 %s35, 1
          %s300 = smul.addr %s299, 8
          %s301 = scalar_lea.vmem [#allocation2], %s300
          %s303 = ssub.s32 128, 128
          %304 = vsyncadd %s298, %s303
          %s305 = smul.addr %s25, 128
          %s306 = scalar_lea.hbm %s0, %s305
          %s308 = sshll.u32 %s301, 4
          %s309 = int_to_ptr.vmem [resolvable:$true] %s308
          %311 = dma.hbm_to_vmem [thread:$0]  %s306, 128, %s309, %s298
        $region44: #{_gate_call.1} parent=39 // pred_fallthru
          _
        // Predicated region
        $region45: #{_gate_call.1} parent=39 // pred_check
          %p312 = pneg %p71
        $region46: #{_gate_call.1} parent=39 // pred_check_branch
          %314 = sbr.rel (%p312) target = $region48
        $region47: #{_gate_call.1} parent=39 // pred_region
          %s315 = sand.u32 %s25, 1
          %s316 = scalar_lea.sflag [#allocation7], %s315
          %s317 = sand.u32 %s61, 1
          %s318 = smul.addr %s317, 8
          %s319 = scalar_lea.vmem [#allocation6], %s318
          %s321 = ssub.s32 128, 128
          %322 = vsyncadd %s316, %s321
          %s323 = smul.addr %s25, 128
          %s324 = scalar_lea.hbm %s1, %s323
          %s326 = sshll.u32 %s319, 4
          %s327 = int_to_ptr.vmem [resolvable:$true] %s326
          %329 = dma.hbm_to_vmem [thread:$0]  %s324, 128, %s327, %s316
        $region48: #{_gate_call.1} parent=39 // pred_fallthru
          _
      $region40: #{_gate_call.1} parent=5 // pred_fallthru
        _
      %p330 = scmp.le.s32.totalorder 1, %s25
      %p331 = scmp.lt.s32.totalorder %s25, 3
      %p332 = pnand %p330, %p331
      %p333 = pneg %p332
      // Predicated region
      $region49: #{_gate_call.1} parent=5 // pred_check
        _
      $region50: #{_gate_call.1} parent=5 // pred_check_branch
        %335 = sbr.rel (%p332) target = $region52
      $region51: #{_gate_call.1} parent=5 // pred_region
        %s336 = ssub.s32 %s25, 1
        %s337 = sand.u32 %s38, 1
        %s338 = scalar_lea.sflag [#allocation3], %s337
        %s339 = sand.u32 %s38, 1
        %s340 = smul.addr %s339, 8
        %s341 = scalar_lea.vmem [#allocation2], %s340
        // Predicated region
        $region53: #{_gate_call.1} parent=51 // pred_check
          %p342 = pneg %p51
        $region54: #{_gate_call.1} parent=51 // pred_check_branch
          %344 = sbr.rel (%p342) target = $region56
        $region55: #{_gate_call.1} parent=51 // pred_region
          %345 = dma.done %s338, 128
        $region56: #{_gate_call.1} parent=51 // pred_fallthru
          _
        %s346 = sand.u32 %s30, 1
        %s347 = scalar_lea.sflag [#allocation7], %s346
        %s348 = sand.u32 %s64, 1
        %s349 = smul.addr %s348, 8
        %s350 = scalar_lea.vmem [#allocation6], %s349
        // Predicated region
        $region57: #{_gate_call.1} parent=51 // pred_check
          %p351 = pneg %p77
        $region58: #{_gate_call.1} parent=51 // pred_check_branch
          %353 = sbr.rel (%p351) target = $region60
        $region59: #{_gate_call.1} parent=51 // pred_region
          %354 = dma.done %s347, 128
        $region60: #{_gate_call.1} parent=51 // pred_fallthru
          _
        // Predicated region
        $region61: #{_gate_call.1} parent=51 // pred_check
          %p355 = pneg %p140
        $region62: #{_gate_call.1} parent=51 // pred_check_branch
          %357 = sbr.rel (%p355) target = $region64
        $region63: #{_gate_call.1} parent=51 // pred_region
          %358 = dma.done [#allocation5], 16
        $region64: #{_gate_call.1} parent=51 // pred_fallthru
          _
        // Predicated region
        $region65: #{_gate_call.1} parent=51 // pred_check
          %p359 = pneg %p161
        $region66: #{_gate_call.1} parent=51 // pred_check_branch
          %361 = sbr.rel (%p359) target = $region68
        $region67: #{_gate_call.1} parent=51 // pred_region
          %362 = dma.done [#allocation7], 512
        $region68: #{_gate_call.1} parent=51 // pred_fallthru
          _
        // Predicated region
        $region69: #{_gate_call.1} parent=51 // pred_check
          %p363 = pneg %p182
        $region70: #{_gate_call.1} parent=51 // pred_check_branch
          %365 = sbr.rel (%p363) target = $region72
        $region71: #{_gate_call.1} parent=51 // pred_region
          %366 = dma.done [#allocation11], 512
        $region72: #{_gate_call.1} parent=51 // pred_fallthru
          _
        %367 = sfence
        %s368 = sand.u32 %s38, 1
        %s369 = scalar_lea.sflag [#allocation3], %s368
        %s370 = sand.u32 %s38, 1
        %s371 = smul.addr %s370, 8
        %s372 = scalar_lea.vmem [#allocation2], %s371
        %p373 = pneg %p51
        %p374 = pneg %p48
        %s375 = sand.u32 %s30, 1
        %s376 = scalar_lea.sflag [#allocation7], %s375
        %s377 = sand.u32 %s64, 1
        %s378 = smul.addr %s377, 8
        %s379 = scalar_lea.vmem [#allocation6], %s378
        %p380 = pneg %p77
        %p381 = pneg %p74
        %p382 = pneg %p98
        %p383 = pneg %p95
        %p384 = pneg %p119
        %p385 = pneg %p116
        %p386 = pneg %p140
        %p387 = pneg %p137
        %p388 = pneg %p161
        %p389 = pneg %p158
        %p390 = pneg %p182
        %p391 = pneg %p179
        %p392 = pneg %p203
        %p393 = pneg %p200
        %p394 = pneg %p229
        %p395 = pneg %p226
        %s396 = sand.u32 %s216, 1
        %s397 = scalar_lea.sflag [#allocation4], %s396
        %s398 = sand.u32 %s216, 1
        %s399 = smul.addr %s398, 8
        %s400 = scalar_lea.vmem [#allocation12], %s399
        %v401 = vld [vmem:[%s341] sm:$0xff]
        %v402 = vld [vmem:[%s350] sm:$0xff]
        %v403 = vld [vmem:[%s2] sm:$0x1]
        %v404 = vld [vmem:[%s2 + $0x1] sm:$0x1]
        %v405 = vld [vmem:[%s3] sm:$0x1]
        %v406 = vld [vmem:[%s3 + $0x1] sm:$0x1]
        %v407 = vlaneseq
        %v408 = vshrl.u32 %v407, 7
        %v409 = vsub.s32 0, %v408
        %v410 = vrot.slane %v403, %v409
        %v411 = vmul.f32 %v401, %v410
        %v412 = vlaneseq
        %v413 = vshrl.u32 %v412, 7
        %v414 = vsub.s32 0, %v413
        %v415 = vrot.slane %v404, %v414
        %v416 = vmul.f32 %v402, %v415
        %v417 = vadd.f32 %v411, %v416
        %vm418 = vcmask 261120
        %v419 = vsel %vm418, %v417, 0.0
        %420 = vadd.xlane.f32.xlu0 %v419
        %v421 = vpop.xlane.xlu0 %420
        %s422 = sld [smem:[#allocation8]]
        %v423 = vstv %s422
        %v424 = vadd.f32 %v421, %v423
        %v425 = vlaneseq
        %v426 = vshrl.u32 %v425, 7
        %v427 = vsub.s32 0, %v426
        %v428 = vrot.slane %v405, %v427
        %v429 = vmul.f32 %v401, %v428
        %v430 = vlaneseq
        %v431 = vshrl.u32 %v430, 7
        %v432 = vsub.s32 0, %v431
        %v433 = vrot.slane %v406, %v432
        %v434 = vmul.f32 %v402, %v433
        %v435 = vadd.f32 %v429, %v434
        %v436 = vsel %vm418, %v435, 0.0
        %437 = vadd.xlane.f32.xlu0 %v436
        %v438 = vpop.xlane.xlu0 %437
        %s439 = sld [smem:[#allocation8 + $0x1]]
        %v440 = vstv %s439
        %v441 = vadd.f32 %v438, %v440
        %v442 = vxor.u32 %v424, 2147483648
        %v443 = vmul.f32 %v442, 1.442695
        %v444 = vpow.pop %v443
        %v445 = vadd.f32 %v444, 1.0
        %v446 = vrcp.pop %v445
        %v447 = vmul.f32 1.0, %v446
        %v448 = vxor.u32 %v441, 2147483648
        %v449 = vmul.f32 %v448, 1.442695
        %v450 = vpow.pop %v449
        %v451 = vadd.f32 %v450, 1.0
        %v452 = vrcp.pop %v451
        %v453 = vmul.f32 1.0, %v452
        %v454 = vmul.f32 %v402, %v447
        %v455 = vld [vmem:[#allocation9] sm:$0xff]
        %v456 = vld [vmem:[#allocation9 + $0x8] sm:$0xff]
        %v457 = vld [vmem:[#allocation9 + $0x10] sm:$0xff]
        %v458 = vld [vmem:[#allocation9 + $0x18] sm:$0xff]
        %v459 = vld [vmem:[#allocation10] sm:$0xff]
        %v460 = vld [vmem:[#allocation10 + $0x8] sm:$0xff]
        %v461 = vld [vmem:[#allocation10 + $0x10] sm:$0xff]
        %v462 = vld [vmem:[#allocation10 + $0x18] sm:$0xff]
        %v464 = vsel %vm418, %v454, 0
        %466 = vmatprep.subr.mxu0 0.0
        %467 = vmatpush1.msra.mxu0 0.0
        %468 = vmatprep.subr.mxu0 0.0
        %469 = vmatpush1.msra.mxu0 0.0
        %470 = vmatprep.subr.mxu0 0.0
        %471 = vmatpush1.msra.mxu0 0.0
        %472 = vmatprep.subr.mxu0 0.0
        %473 = vmatpush1.msra.mxu0 0.0
        %474 = vmatprep.subr.mxu0 0.0
        %475 = vmatpush1.msra.mxu0 0.0
        %476 = vmatprep.subr.mxu0 0.0
        %477 = vmatpush1.msra.mxu0 0.0
        %478 = vmatprep.subr.mxu0 0.0
        %479 = vmatpush1.msra.mxu0 0.0
        %480 = vmatprep.subr.mxu0 0.0
        %481 = vmatpush1.msra.mxu0 0.0
        %482 = vmatprep.subr.mxu0 0.0
        %483 = vmatpush1.msra.mxu0 0.0
        %484 = vmatprep.subr.mxu0 0.0
        %485 = vmatpush1.msra.mxu0 0.0
        %486 = vmatprep.subr.mxu0 0.0
        %487 = vmatpush1.msra.mxu0 0.0
        %488 = vmatprep.subr.mxu0 0.0
        %489 = vmatpush1.msra.mxu0 0.0
        %490 = vmatprep.subr.mxu0 0.0
        %491 = vmatpush1.msra.mxu0 %v462
        %492 = vmatprep.subr.mxu0 0.0
        %493 = vmatpush1.msra.mxu0 %v461
        %494 = vmatprep.subr.mxu0 0.0
        %495 = vmatpush1.msra.mxu0 %v460
        %496 = vmatprep.subr.mxu0 0.0
        %497 = vmatpush1.msra.mxu0 %v459
        %498 = vmatprep.subr.mxu0 0.0
        %499 = vmatpush2.msra.mxu0 0.0
        %500 = vmatprep.subr.mxu0 0.0
        %501 = vmatpush2.msra.mxu0 0.0
        %502 = vmatprep.subr.mxu0 0.0
        %503 = vmatpush2.msra.mxu0 0.0
        %504 = vmatprep.subr.mxu0 0.0
        %505 = vmatpush2.msra.mxu0 0.0
        %506 = vmatprep.subr.mxu0 0.0
        %507 = vmatpush2.msra.mxu0 0.0
        %508 = vmatprep.subr.mxu0 0.0
        %509 = vmatpush2.msra.mxu0 0.0
        %510 = vmatprep.subr.mxu0 0.0
        %511 = vmatpush2.msra.mxu0 0.0
        %512 = vmatprep.subr.mxu0 0.0
        %513 = vmatpush2.msra.mxu0 0.0
        %514 = vmatprep.subr.mxu0 0.0
        %515 = vmatpush2.msra.mxu0 0.0
        %516 = vmatprep.subr.mxu0 0.0
        %517 = vmatpush2.msra.mxu0 0.0
        %518 = vmatprep.subr.mxu0 0.0
        %519 = vmatpush2.msra.mxu0 0.0
        %520 = vmatprep.subr.mxu0 0.0
        %521 = vmatpush2.msra.mxu0 0.0
        %522 = vmatprep.subr.mxu0 0.0
        %523 = vmatpush2.msra.mxu0 0.0
        %524 = vmatprep.subr.mxu0 0.0
        %525 = vmatpush2.msra.mxu0 0.0
        %526 = vmatprep.subr.mxu0 0.0
        %527 = vmatpush2.msra.mxu0 0.0
        %528 = vmatprep.subr.mxu0 0.0
        %529 = vmatpush2.msra.mxu0 0.0
        %530 = vmatprep.mubr.f32.mxu0 0.0
        %531 = vmatmul.mubr.f32.gmra.mxu0 %v464
        %v532 = vpop.f32.mrf.mxu0
        %v533 = vadd.f32 0.0, %v532
        %v534 = vpop.f32.mrf.mxu0
        %535 = vdwg.mxu0
        %v537 = vsel %vm418, %v401, 0
        %539 = vmatprep.subr.mxu0 0.0
        %540 = vmatpush1.msra.mxu0 0.0
        %541 = vmatprep.subr.mxu0 0.0
        %542 = vmatpush1.msra.mxu0 0.0
        %543 = vmatprep.subr.mxu0 0.0
        %544 = vmatpush1.msra.mxu0 0.0
        %545 = vmatprep.subr.mxu0 0.0
        %546 = vmatpush1.msra.mxu0 0.0
        %547 = vmatprep.subr.mxu0 0.0
        %548 = vmatpush1.msra.mxu0 0.0
        %549 = vmatprep.subr.mxu0 0.0
        %550 = vmatpush1.msra.mxu0 0.0
        %551 = vmatprep.subr.mxu0 0.0
        %552 = vmatpush1.msra.mxu0 0.0
        %553 = vmatprep.subr.mxu0 0.0
        %554 = vmatpush1.msra.mxu0 0.0
        %555 = vmatprep.subr.mxu0 0.0
        %556 = vmatpush1.msra.mxu0 0.0
        %557 = vmatprep.subr.mxu0 0.0
        %558 = vmatpush1.msra.mxu0 0.0
        %559 = vmatprep.subr.mxu0 0.0
        %560 = vmatpush1.msra.mxu0 0.0
        %561 = vmatprep.subr.mxu0 0.0
        %562 = vmatpush1.msra.mxu0 0.0
        %563 = vmatprep.subr.mxu0 0.0
        %564 = vmatpush1.msra.mxu0 %v458
        %565 = vmatprep.subr.mxu0 0.0
        %566 = vmatpush1.msra.mxu0 %v457
        %567 = vmatprep.subr.mxu0 0.0
        %568 = vmatpush1.msra.mxu0 %v456
        %569 = vmatprep.subr.mxu0 0.0
        %570 = vmatpush1.msra.mxu0 %v455
        %571 = vmatprep.subr.mxu0 0.0
        %572 = vmatpush2.msra.mxu0 0.0
        %573 = vmatprep.subr.mxu0 0.0
        %574 = vmatpush2.msra.mxu0 0.0
        %575 = vmatprep.subr.mxu0 0.0
        %576 = vmatpush2.msra.mxu0 0.0
        %577 = vmatprep.subr.mxu0 0.0
        %578 = vmatpush2.msra.mxu0 0.0
        %579 = vmatprep.subr.mxu0 0.0
        %580 = vmatpush2.msra.mxu0 0.0
        %581 = vmatprep.subr.mxu0 0.0
        %582 = vmatpush2.msra.mxu0 0.0
        %583 = vmatprep.subr.mxu0 0.0
        %584 = vmatpush2.msra.mxu0 0.0
        %585 = vmatprep.subr.mxu0 0.0
        %586 = vmatpush2.msra.mxu0 0.0
        %587 = vmatprep.subr.mxu0 0.0
        %588 = vmatpush2.msra.mxu0 0.0
        %589 = vmatprep.subr.mxu0 0.0
        %590 = vmatpush2.msra.mxu0 0.0
        %591 = vmatprep.subr.mxu0 0.0
        %592 = vmatpush2.msra.mxu0 0.0
        %593 = vmatprep.subr.mxu0 0.0
        %594 = vmatpush2.msra.mxu0 0.0
        %595 = vmatprep.subr.mxu0 0.0
        %596 = vmatpush2.msra.mxu0 0.0
        %597 = vmatprep.subr.mxu0 0.0
        %598 = vmatpush2.msra.mxu0 0.0
        %599 = vmatprep.subr.mxu0 0.0
        %600 = vmatpush2.msra.mxu0 0.0
        %601 = vmatprep.subr.mxu0 0.0
        %602 = vmatpush2.msra.mxu0 0.0
        %603 = vmatprep.mubr.f32.mxu0 0.0
        %604 = vmatmul.mubr.f32.gmra.mxu0 %v537
        %v605 = vpop.f32.mrf.mxu0
        %v606 = vadd.f32 %v533, %v605
        %v607 = vpop.f32.mrf.mxu0
        %608 = vdwg.mxu0
        %v609 = vld [vmem:[%s7] sm:$0x1]
        %v611 = vlaneseq
        %v612 = vshrl.u32 %v611, 7
        %v613 = vsub.s32 0, %v612
        %v614 = vrot.slane %v609, %v613
        %v616 = vadd.f32 %v606, %v614
        %v617 = vsub.f32 %v616, %v402
        %v618 = vmul.f32 %v453, %v617
        %v619 = vadd.f32 %v402, %v618
        %620 = vst.msk [vmem:[%s400] sm:$0xff] %vm418, %v619
        %s621 = sand.u32 %s216, 1
        %s622 = scalar_lea.sflag [#allocation4], %s621
        %s623 = sand.u32 %s216, 1
        %s624 = smul.addr %s623, 8
        %s625 = scalar_lea.vmem [#allocation12], %s624
        // Predicated region
        $region73: #{_gate_call.1} parent=51 // pred_check
          %p626 = pneg %p226
        $region74: #{_gate_call.1} parent=51 // pred_check_branch
          %628 = sbr.rel (%p626) target = $region76
        $region75: #{_gate_call.1} parent=51 // pred_region
          %s630 = ssub.s32 128, 128
          %631 = vsyncadd %s622, %s630
          %s632 = smul.addr %s30, 128
          %s633 = scalar_lea.hbm %s8, %s632
          %s635 = sshll.u32 %s625, 4
          %s636 = int_to_ptr.vmem [resolvable:$true] %s635
          %638 = dma.vmem_to_hbm [thread:$0]  %s636, 128, %s633, %s622
        $region76: #{_gate_call.1} parent=51 // pred_fallthru
          _
      $region52: #{_gate_call.1} parent=5 // pred_fallthru
        _
      %p639 = scmp.le.s32.totalorder 2, %s25
      // Predicated region
      $region77: #{_gate_call.1} parent=5 // pred_check
        %p640 = pneg %p639
      $region78: #{_gate_call.1} parent=5 // pred_check_branch
        %642 = sbr.rel (%p640) target = $region80
      $region79: #{_gate_call.1} parent=5 // pred_region
        %s643 = ssub.s32 %s25, 2
        // Predicated region
        $region81: #{_gate_call.1} parent=79 // pred_check
          %p644 = pneg %p232
        $region82: #{_gate_call.1} parent=79 // pred_check_branch
          %646 = sbr.rel (%p644) target = $region84
        $region83: #{_gate_call.1} parent=79 // pred_region
          %s647 = sand.u32 %s217, 1
          %s648 = scalar_lea.sflag [#allocation4], %s647
          %s649 = sand.u32 %s217, 1
          %s650 = smul.addr %s649, 8
          %s651 = scalar_lea.vmem [#allocation12], %s650
          %652 = dma.done %s648, 128
        $region84: #{_gate_call.1} parent=79 // pred_fallthru
          _
      $region80: #{_gate_call.1} parent=5 // pred_fallthru
        _
    $region6: #{_gate_call.1} parent=1 // loop_footer
      %s29 = sadd.s32 1, %s25
    $region7: #{_gate_call.1} parent=1 // loop_footer_branch
      %24 = sbr.rel target = $region3
    $region8: #{_gate_call.1} parent=1 // loop_exit
      _
    %653 = vsyncpa [#allocation3], 1
    %s654 = scalar_lea.sflag [#allocation3], 1
    %655 = vsyncpa %s654, 1
    %656 = vsyncpa [#allocation7], 1
    %s657 = scalar_lea.sflag [#allocation7], 1
    %658 = vsyncpa %s657, 1
    %659 = vsyncpa [#allocation11], 1
    %660 = vsyncpa [#allocation4], 1
    %s661 = scalar_lea.sflag [#allocation4], 1
    %662 = vsyncpa %s661, 1
    %663 = vsyncpa [#allocation5], 1
    %s664 = scalar_lea.sflag [#allocation5], 1
    %665 = vsyncpa %s664, 1

// kernel: _gate_call.1
$region0: #{_gate_call.1}
  #allocation0 [shape = 'u32[]', space=smem, size = 0x4, offset = 0x4, fixed_abs, tag = 'smem constant byte address 0x4 - core index']
  #allocation1 [shape = 'u32[144,128]{1,0:T(1,128)}', space=vmem, size = 0x12000, scoped, tag = 'internal scratch']
  %s0 = inlined_call_operand.hbm [shape: f32[16,32], index: 0, kind: input, shape index: {}]
  %s1 = inlined_call_operand.hbm [shape: f32[16,32], index: 1, kind: input, shape index: {}]
  %s2 = inlined_call_operand.vmem [shape: f32[2,32], index: 2, kind: input, shape index: {}]
  %s3 = inlined_call_operand.vmem [shape: f32[2,32], index: 3, kind: input, shape index: {}]
  %s4 = inlined_call_operand.vmem [shape: f32[2], index: 4, kind: input, shape index: {}]
  %s5 = inlined_call_operand.hbm [shape: f32[32,32], index: 5, kind: input, shape index: {}]
  %s6 = inlined_call_operand.hbm [shape: f32[32,32], index: 6, kind: input, shape index: {}]
  %s7 = inlined_call_operand.vmem [shape: f32[1,32], index: 7, kind: input, shape index: {}]
  %s8 = inlined_call_operand.hbm [shape: f32[16,32], index: 8, kind: output, shape index: {}]
  %s9 = sld [smem:[#allocation0]]
  $region85: #{_gate_call.1} parent=0
    _
  %s11 = ssub.s32 1, %s9
  %s12 = scalar_select 0, %s11, %s9
  $region1: #{_gate_call.1} parent=0
    #allocation2 [shape = 'u8[8192]{0}', space=vmem, size = 0x2000, scoped, tag = 'input window, operand 0']
    #allocation3 [shape = 's32[2]{0}', space=sflag, size = 0x8, scoped, tag = 'scoped memory for _gate_call.1']
    #allocation4 [shape = 's32[2]{0}', space=sflag, size = 0x8, scoped, tag = 'scoped memory for _gate_call.1']
    #allocation5 [shape = 's32[2]{0}', space=sflag, size = 0x8, scoped, tag = 'scoped memory for _gate_call.1']
    #allocation6 [shape = 'u8[8192]{0}', space=vmem, size = 0x2000, scoped, tag = 'input window, operand 1']
    #allocation7 [shape = 's32[2]{0}', space=sflag, size = 0x8, scoped, tag = 'scoped memory for _gate_call.1']
    #allocation8 [shape = 'u8[512]{0}', space=smem, size = 0x200, scoped, tag = 'input window, operand 4, single buffered']
    #allocation9 [shape = 'u8[16384]{0}', space=vmem, size = 0x4000, scoped, tag = 'input window, operand 5, single buffered']
    #allocation10 [shape = 'u8[16384]{0}', space=vmem, size = 0x4000, scoped, tag = 'input window, operand 6, single buffered']
    #allocation11 [shape = 's32[1]{0}', space=sflag, size = 0x4, scoped, tag = 'scoped memory for _gate_call.1']
    #allocation12 [shape = 'u8[8192]{0}', space=vmem, size = 0x2000, scoped, tag = 'output window, operand 0']
    %13 = vsyncpa [#allocation3], 0
    %s14 = scalar_lea.sflag [#allocation3], 1
    %15 = vsyncpa %s14, 0
    %16 = vsyncpa [#allocation7], 0
    %s17 = scalar_lea.sflag [#allocation7], 1
    %18 = vsyncpa %s17, 0
    %19 = vsyncpa [#allocation5], 0
    %20 = vsyncpa [#allocation11], 0
    %21 = vsyncpa [#allocation4], 0
    %s22 = scalar_lea.sflag [#allocation4], 1
    %23 = vsyncpa %s22, 0
    loop: start=0, step=1, limit=4
    $region2: #{_gate_call.1} parent=1 // loop_pre_header
      _
    $region3: #{_gate_call.1} parent=1 // loop_header
      %s25 = sphi 0, %s29
      %p26 = scmp.ge.s32.totalorder %s25, 4
      %s35 = sphi 0, %s37
      %s38 = sphi 0, %s35
      %s39 = sphi 0, %s38
      %s55 = sphi 0, %s39
      %s61 = sphi 0, %s63
      %s64 = sphi 0, %s61
      %s65 = sphi 0, %s64
      %s81 = sphi 0, %s65
      %s85 = sphi 0, %s85
      %s87 = sphi 0, %s85
      %s88 = sphi 0, %s87
      %s102 = sphi 0, %s88
      %s106 = sphi 0, %s106
      %s108 = sphi 0, %s106
      %s109 = sphi 0, %s108
      %s123 = sphi 0, %s109
      %s127 = sphi 0, %s127
      %s129 = sphi 0, %s127
      %s130 = sphi 0, %s129
      %s144 = sphi 0, %s130
      %s148 = sphi 0, %s148
      %s150 = sphi 0, %s148
      %s151 = sphi 0, %s150
      %s165 = sphi 0, %s151
      %s169 = sphi 0, %s169
      %s171 = sphi 0, %s169
      %s172 = sphi 0, %s171
      %s186 = sphi 0, %s172
      %s190 = sphi 0, %s190
      %s192 = sphi 0, %s190
      %s193 = sphi 0, %s192
      %s207 = sphi 0, %s193
      %s213 = sphi 0, %s215
      %s216 = sphi 0, %s213
      %s217 = sphi 0, %s216
      %s233 = sphi 0, %s217
    $region4: #{_gate_call.1} parent=1 // loop_header_branch
      %28 = sbr.rel (%p26) target = $region8
    $region5: #{_gate_call.1} parent=1 // loop_body
      %s30 = ssub.s32 %s25, 1
      %s31 = ssub.s32 %s25, 2
      %s32 = sadd.s32 %s25, 1
      %s33 = ssub.s32 %s25, %s32
      %p34 = scmp.eq.s32.totalorder %s33, 0
      %s36 = sadd.s32 %s35, 1
      %s37 = scalar_select %p34, %s35, %s36
      %p40 = pneg %p34
      %p41 = scmp.eq.s32.totalorder %s25, 1
      %p42 = por %p40, %p41
      %p43 = scmp.ne.s32.totalorder %s35, %s38
      %p44 = scmp.eq.s32.totalorder %s25, 0
      %p45 = por %p43, %p44
      %p46 = scmp.ne.s32.totalorder %s35, %s38
      %p47 = scmp.eq.s32.totalorder %s30, 1
      %p48 = por %p46, %p47
      %p49 = scmp.ne.s32.totalorder %s38, %s39
      %p50 = scmp.eq.s32.totalorder %s30, 0
      %p51 = por %p49, %p50
      %p52 = scmp.ne.s32.totalorder %s38, %s39
      %p53 = scmp.eq.s32.totalorder %s31, 1
      %p54 = por %p52, %p53
      %p56 = scmp.ne.s32.totalorder %s39, %s55
      %p57 = scmp.eq.s32.totalorder %s31, 0
      %p58 = por %p56, %p57
      %s59 = ssub.s32 %s25, %s32
      %p60 = scmp.eq.s32.totalorder %s59, 0
      %s62 = sadd.s32 %s61, 1
      %s63 = scalar_select %p60, %s61, %s62
      %p66 = pneg %p60
      %p67 = scmp.eq.s32.totalorder %s25, 1
      %p68 = por %p66, %p67
      %p69 = scmp.ne.s32.totalorder %s61, %s64
      %p70 = scmp.eq.s32.totalorder %s25, 0
      %p71 = por %p69, %p70
      %p72 = scmp.ne.s32.totalorder %s61, %s64
      %p73 = scmp.eq.s32.totalorder %s30, 1
      %p74 = por %p72, %p73
      %p75 = scmp.ne.s32.totalorder %s64, %s65
      %p76 = scmp.eq.s32.totalorder %s30, 0
      %p77 = por %p75, %p76
      %p78 = scmp.ne.s32.totalorder %s64, %s65
      %p79 = scmp.eq.s32.totalorder %s31, 1
      %p80 = por %p78, %p79
      %p82 = scmp.ne.s32.totalorder %s65, %s81
      %p83 = scmp.eq.s32.totalorder %s31, 0
      %p84 = por %p82, %p83
      %s86 = sadd.s32 %s85, 1
      %p89 = scmp.eq.s32.totalorder %s25, 1
      %p90 = scmp.ne.s32.totalorder %s85, %s87
      %p91 = scmp.eq.s32.totalorder %s25, 0
      %p92 = por %p90, %p91
      %p93 = scmp.ne.s32.totalorder %s85, %s87
      %p94 = scmp.eq.s32.totalorder %s30, 1
      %p95 = por %p93, %p94
      %p96 = scmp.ne.s32.totalorder %s87, %s88
      %p97 = scmp.eq.s32.totalorder %s30, 0
      %p98 = por %p96, %p97
      %p99 = scmp.ne.s32.totalorder %s87, %s88
      %p100 = scmp.eq.s32.totalorder %s31, 1
      %p101 = por %p99, %p100
      %p103 = scmp.ne.s32.totalorder %s88, %s102
      %p104 = scmp.eq.s32.totalorder %s31, 0
      %p105 = por %p103, %p104
      %s107 = sadd.s32 %s106, 1
      %p110 = scmp.eq.s32.totalorder %s25, 1
      %p111 = scmp.ne.s32.totalorder %s106, %s108
      %p112 = scmp.eq.s32.totalorder %s25, 0
      %p113 = por %p111, %p112
      %p114 = scmp.ne.s32.totalorder %s106, %s108
      %p115 = scmp.eq.s32.totalorder %s30, 1
      %p116 = por %p114, %p115
      %p117 = scmp.ne.s32.totalorder %s108, %s109
      %p118 = scmp.eq.s32.totalorder %s30, 0
      %p119 = por %p117, %p118
      %p120 = scmp.ne.s32.totalorder %s108, %s109
      %p121 = scmp.eq.s32.totalorder %s31, 1
      %p122 = por %p120, %p121
      %p124 = scmp.ne.s32.totalorder %s109, %s123
      %p125 = scmp.eq.s32.totalorder %s31, 0
      %p126 = por %p124, %p125
      %s128 = sadd.s32 %s127, 1
      %p131 = scmp.eq.s32.totalorder %s25, 1
      %p132 = scmp.ne.s32.totalorder %s127, %s129
      %p133 = scmp.eq.s32.totalorder %s25, 0
      %p134 = por %p132, %p133
      %p135 = scmp.ne.s32.totalorder %s127, %s129
      %p136 = scmp.eq.s32.totalorder %s30, 1
      %p137 = por %p135, %p136
      %p138 = scmp.ne.s32.totalorder %s129, %s130
      %p139 = scmp.eq.s32.totalorder %s30, 0
      %p140 = por %p138, %p139
      %p141 = scmp.ne.s32.totalorder %s129, %s130
      %p142 = scmp.eq.s32.totalorder %s31, 1
      %p143 = por %p141, %p142
      %p145 = scmp.ne.s32.totalorder %s130, %s144
      %p146 = scmp.eq.s32.totalorder %s31, 0
      %p147 = por %p145, %p146
      %s149 = sadd.s32 %s148, 1
      %p152 = scmp.eq.s32.totalorder %s25, 1
      %p153 = scmp.ne.s32.totalorder %s148, %s150
      %p154 = scmp.eq.s32.totalorder %s25, 0
      %p155 = por %p153, %p154
      %p156 = scmp.ne.s32.totalorder %s148, %s150
      %p157 = scmp.eq.s32.totalorder %s30, 1
      %p158 = por %p156, %p157
      %p159 = scmp.ne.s32.totalorder %s150, %s151
      %p160 = scmp.eq.s32.totalorder %s30, 0
      %p161 = por %p159, %p160
      %p162 = scmp.ne.s32.totalorder %s150, %s151
      %p163 = scmp.eq.s32.totalorder %s31, 1
      %p164 = por %p162, %p163
      %p166 = scmp.ne.s32.totalorder %s151, %s165
      %p167 = scmp.eq.s32.totalorder %s31, 0
      %p168 = por %p166, %p167
      %s170 = sadd.s32 %s169, 1
      %p173 = scmp.eq.s32.totalorder %s25, 1
      %p174 = scmp.ne.s32.totalorder %s169, %s171
      %p175 = scmp.eq.s32.totalorder %s25, 0
      %p176 = por %p174, %p175
      %p177 = scmp.ne.s32.totalorder %s169, %s171
      %p178 = scmp.eq.s32.totalorder %s30, 1
      %p179 = por %p177, %p178
      %p180 = scmp.ne.s32.totalorder %s171, %s172
      %p181 = scmp.eq.s32.totalorder %s30, 0
      %p182 = por %p180, %p181
      %p183 = scmp.ne.s32.totalorder %s171, %s172
      %p184 = scmp.eq.s32.totalorder %s31, 1
      %p185 = por %p183, %p184
      %p187 = scmp.ne.s32.totalorder %s172, %s186
      %p188 = scmp.eq.s32.totalorder %s31, 0
      %p189 = por %p187, %p188
      %s191 = sadd.s32 %s190, 1
      %p194 = scmp.eq.s32.totalorder %s25, 1
      %p195 = scmp.ne.s32.totalorder %s190, %s192
      %p196 = scmp.eq.s32.totalorder %s25, 0
      %p197 = por %p195, %p196
      %p198 = scmp.ne.s32.totalorder %s190, %s192
      %p199 = scmp.eq.s32.totalorder %s30, 1
      %p200 = por %p198, %p199
      %p201 = scmp.ne.s32.totalorder %s192, %s193
      %p202 = scmp.eq.s32.totalorder %s30, 0
      %p203 = por %p201, %p202
      %p204 = scmp.ne.s32.totalorder %s192, %s193
      %p205 = scmp.eq.s32.totalorder %s31, 1
      %p206 = por %p204, %p205
      %p208 = scmp.ne.s32.totalorder %s193, %s207
      %p209 = scmp.eq.s32.totalorder %s31, 0
      %p210 = por %p208, %p209
      %s211 = ssub.s32 %s25, %s32
      %p212 = scmp.eq.s32.totalorder %s211, 0
      %s214 = sadd.s32 %s213, 1
      %s215 = scalar_select %p212, %s213, %s214
      %p218 = pneg %p212
      %p219 = scmp.eq.s32.totalorder %s25, 1
      %p220 = por %p218, %p219
      %p221 = scmp.ne.s32.totalorder %s213, %s216
      %p222 = scmp.eq.s32.totalorder %s25, 0
      %p223 = por %p221, %p222
      %p224 = scmp.ne.s32.totalorder %s213, %s216
      %p225 = scmp.eq.s32.totalorder %s30, 1
      %p226 = por %p224, %p225
      %p227 = scmp.ne.s32.totalorder %s216, %s217
      %p228 = scmp.eq.s32.totalorder %s30, 0
      %p229 = por %p227, %p228
      %p230 = scmp.ne.s32.totalorder %s216, %s217
      %p231 = scmp.eq.s32.totalorder %s31, 1
      %p232 = por %p230, %p231
      %p234 = scmp.ne.s32.totalorder %s217, %s233
      %p235 = scmp.eq.s32.totalorder %s31, 0
      %p236 = por %p234, %p235
      %p237 = scmp.le.s32.totalorder 1, %s25
      %p238 = scmp.lt.s32.totalorder %s25, 3
      %p239 = pnand %p237, %p238
      %p240 = pneg %p239
      // Predicated region
      $region9: #{_gate_call.1} parent=5 // pred_check
        _
      $region10: #{_gate_call.1} parent=5 // pred_check_branch
        %242 = sbr.rel (%p239) target = $region12
      $region11: #{_gate_call.1} parent=5 // pred_region
        %s243 = ssub.s32 %s25, 1
        // Predicated region
        $region13: #{_gate_call.1} parent=11 // pred_check
          %p244 = pneg %p98
        $region14: #{_gate_call.1} parent=11 // pred_check_branch
          %246 = sbr.rel (%p244) target = $region16
        $region15: #{_gate_call.1} parent=11 // pred_region
          _
        $region16: #{_gate_call.1} parent=11 // pred_fallthru
          _
        // Predicated region
        $region17: #{_gate_call.1} parent=11 // pred_check
          %p247 = pneg %p119
        $region18: #{_gate_call.1} parent=11 // pred_check_branch
          %249 = sbr.rel (%p247) target = $region20
        $region19: #{_gate_call.1} parent=11 // pred_region
          _
        $region20: #{_gate_call.1} parent=11 // pred_fallthru
          _
        // Predicated region
        $region21: #{_gate_call.1} parent=11 // pred_check
          %p250 = pneg %p140
        $region22: #{_gate_call.1} parent=11 // pred_check_branch
          %252 = sbr.rel (%p250) target = $region24
        $region23: #{_gate_call.1} parent=11 // pred_region
          %s254 = ssub.s32 16, 16
          %255 = vsyncadd [#allocation5], %s254
          %s257 = sshll.u32 %s4, 4
          %s258 = int_to_ptr.vmem [resolvable:$true] %s257
          %260 = dma.vmem_to_smem %s258, 16, [#allocation8], [#allocation5]
        $region24: #{_gate_call.1} parent=11 // pred_fallthru
          _
        // Predicated region
        $region25: #{_gate_call.1} parent=11 // pred_check
          %p261 = pneg %p161
        $region26: #{_gate_call.1} parent=11 // pred_check_branch
          %263 = sbr.rel (%p261) target = $region28
        $region27: #{_gate_call.1} parent=11 // pred_region
          %s265 = ssub.s32 512, 512
          %266 = vsyncadd [#allocation7], %s265
          %s267 = sshll.u32 [#allocation9], 4
          %s268 = int_to_ptr.vmem [resolvable:$true] %s267
          %273 = dma.hbm_to_vmem [thread:$0]  %s5, 512, %s268, [#allocation7], 128, 128, 8
        $region28: #{_gate_call.1} parent=11 // pred_fallthru
          _
        // Predicated region
        $region29: #{_gate_call.1} parent=11 // pred_check
          %p274 = pneg %p182
        $region30: #{_gate_call.1} parent=11 // pred_check_branch
          %276 = sbr.rel (%p274) target = $region32
        $region31: #{_gate_call.1} parent=11 // pred_region
          %s278 = ssub.s32 512, 512
          %279 = vsyncadd [#allocation11], %s278
          %s280 = sshll.u32 [#allocation10], 4
          %s281 = int_to_ptr.vmem [resolvable:$true] %s280
          %286 = dma.hbm_to_vmem [thread:$0]  %s6, 512, %s281, [#allocation11], 128, 128, 8
        $region32: #{_gate_call.1} parent=11 // pred_fallthru
          _
        // Predicated region
        $region33: #{_gate_call.1} parent=11 // pred_check
          %p287 = pneg %p203
        $region34: #{_gate_call.1} parent=11 // pred_check_branch
          %289 = sbr.rel (%p287) target = $region36
        $region35: #{_gate_call.1} parent=11 // pred_region
          _
        $region36: #{_gate_call.1} parent=11 // pred_fallthru
          _
      $region12: #{_gate_call.1} parent=5 // pred_fallthru
        _
      %p290 = scmp.lt.s32.totalorder %s25, 2
      // Predicated region
      $region37: #{_gate_call.1} parent=5 // pred_check
        %p291 = pneg %p290
      $region38: #{_gate_call.1} parent=5 // pred_check_branch
        %293 = sbr.rel (%p291) target = $region40
      $region39: #{_gate_call.1} parent=5 // pred_region
        // Predicated region
        $region41: #{_gate_call.1} parent=39 // pred_check
          %p294 = pneg %p45
        $region42: #{_gate_call.1} parent=39 // pred_check_branch
          %296 = sbr.rel (%p294) target = $region44
        $region43: #{_gate_call.1} parent=39 // pred_region
          %s297 = sand.u32 %s35, 1
          %s298 = scalar_lea.sflag [#allocation3], %s297
          %s299 = sand.u32 %s35, 1
          %s300 = smul.addr %s299, 8
          %s301 = scalar_lea.vmem [#allocation2], %s300
          %s303 = ssub.s32 128, 128
          %304 = vsyncadd %s298, %s303
          %s305 = smul.addr %s25, 128
          %s306 = scalar_lea.hbm %s0, %s305
          %s308 = sshll.u32 %s301, 4
          %s309 = int_to_ptr.vmem [resolvable:$true] %s308
          %311 = dma.hbm_to_vmem [thread:$0]  %s306, 128, %s309, %s298
        $region44: #{_gate_call.1} parent=39 // pred_fallthru
          _
        // Predicated region
        $region45: #{_gate_call.1} parent=39 // pred_check
          %p312 = pneg %p71
        $region46: #{_gate_call.1} parent=39 // pred_check_branch
          %314 = sbr.rel (%p312) target = $region48
        $region47: #{_gate_call.1} parent=39 // pred_region
          %s315 = sand.u32 %s25, 1
          %s316 = scalar_lea.sflag [#allocation7], %s315
          %s317 = sand.u32 %s61, 1
          %s318 = smul.addr %s317, 8
          %s319 = scalar_lea.vmem [#allocation6], %s318
          %s321 = ssub.s32 128, 128
          %322 = vsyncadd %s316, %s321
          %s323 = smul.addr %s25, 128
          %s324 = scalar_lea.hbm %s1, %s323
          %s326 = sshll.u32 %s319, 4
          %s327 = int_to_ptr.vmem [resolvable:$true] %s326
          %329 = dma.hbm_to_vmem [thread:$0]  %s324, 128, %s327, %s316
        $region48: #{_gate_call.1} parent=39 // pred_fallthru
          _
      $region40: #{_gate_call.1} parent=5 // pred_fallthru
        _
      %p330 = scmp.le.s32.totalorder 1, %s25
      %p331 = scmp.lt.s32.totalorder %s25, 3
      %p332 = pnand %p330, %p331
      %p333 = pneg %p332
      // Predicated region
      $region49: #{_gate_call.1} parent=5 // pred_check
        _
      $region50: #{_gate_call.1} parent=5 // pred_check_branch
        %335 = sbr.rel (%p332) target = $region52
      $region51: #{_gate_call.1} parent=5 // pred_region
        %s336 = ssub.s32 %s25, 1
        %s337 = sand.u32 %s38, 1
        %s338 = scalar_lea.sflag [#allocation3], %s337
        %s339 = sand.u32 %s38, 1
        %s340 = smul.addr %s339, 8
        %s341 = scalar_lea.vmem [#allocation2], %s340
        // Predicated region
        $region53: #{_gate_call.1} parent=51 // pred_check
          %p342 = pneg %p51
        $region54: #{_gate_call.1} parent=51 // pred_check_branch
          %344 = sbr.rel (%p342) target = $region56
        $region55: #{_gate_call.1} parent=51 // pred_region
          %345 = dma.done %s338, 128
        $region56: #{_gate_call.1} parent=51 // pred_fallthru
          _
        %s346 = sand.u32 %s30, 1
        %s347 = scalar_lea.sflag [#allocation7], %s346
        %s348 = sand.u32 %s64, 1
        %s349 = smul.addr %s348, 8
        %s350 = scalar_lea.vmem [#allocation6], %s349
        // Predicated region
        $region57: #{_gate_call.1} parent=51 // pred_check
          %p351 = pneg %p77
        $region58: #{_gate_call.1} parent=51 // pred_check_branch
          %353 = sbr.rel (%p351) target = $region60
        $region59: #{_gate_call.1} parent=51 // pred_region
          %354 = dma.done %s347, 128
        $region60: #{_gate_call.1} parent=51 // pred_fallthru
          _
        // Predicated region
        $region61: #{_gate_call.1} parent=51 // pred_check
          %p355 = pneg %p140
        $region62: #{_gate_call.1} parent=51 // pred_check_branch
          %357 = sbr.rel (%p355) target = $region64
        $region63: #{_gate_call.1} parent=51 // pred_region
          %358 = dma.done [#allocation5], 16
        $region64: #{_gate_call.1} parent=51 // pred_fallthru
          _
        // Predicated region
        $region65: #{_gate_call.1} parent=51 // pred_check
          %p359 = pneg %p161
        $region66: #{_gate_call.1} parent=51 // pred_check_branch
          %361 = sbr.rel (%p359) target = $region68
        $region67: #{_gate_call.1} parent=51 // pred_region
          %362 = dma.done [#allocation7], 512
        $region68: #{_gate_call.1} parent=51 // pred_fallthru
          _
        // Predicated region
        $region69: #{_gate_call.1} parent=51 // pred_check
          %p363 = pneg %p182
        $region70: #{_gate_call.1} parent=51 // pred_check_branch
          %365 = sbr.rel (%p363) target = $region72
        $region71: #{_gate_call.1} parent=51 // pred_region
          %366 = dma.done [#allocation11], 512
        $region72: #{_gate_call.1} parent=51 // pred_fallthru
          _
        %367 = sfence
        %s368 = sand.u32 %s38, 1
        %s369 = scalar_lea.sflag [#allocation3], %s368
        %s370 = sand.u32 %s38, 1
        %s371 = smul.addr %s370, 8
        %s372 = scalar_lea.vmem [#allocation2], %s371
        %p373 = pneg %p51
        %p374 = pneg %p48
        %s375 = sand.u32 %s30, 1
        %s376 = scalar_lea.sflag [#allocation7], %s375
        %s377 = sand.u32 %s64, 1
        %s378 = smul.addr %s377, 8
        %s379 = scalar_lea.vmem [#allocation6], %s378
        %p380 = pneg %p77
        %p381 = pneg %p74
        %p382 = pneg %p98
        %p383 = pneg %p95
        %p384 = pneg %p119
        %p385 = pneg %p116
        %p386 = pneg %p140
        %p387 = pneg %p137
        %p388 = pneg %p161
        %p389 = pneg %p158
        %p390 = pneg %p182
        %p391 = pneg %p179
        %p392 = pneg %p203
        %p393 = pneg %p200
        %p394 = pneg %p229
        %p395 = pneg %p226
        %s396 = sand.u32 %s216, 1
        %s397 = scalar_lea.sflag [#allocation4], %s396
        %s398 = sand.u32 %s216, 1
        %s399 = smul.addr %s398, 8
        %s400 = scalar_lea.vmem [#allocation12], %s399
        %v401 = vld [vmem:[%s341] sm:$0xff]
        %v402 = vld [vmem:[%s350] sm:$0xff]
        %v403 = vld [vmem:[%s2] sm:$0x1]
        %v404 = vld [vmem:[%s2 + $0x1] sm:$0x1]
        %v405 = vld [vmem:[%s3] sm:$0x1]
        %v406 = vld [vmem:[%s3 + $0x1] sm:$0x1]
        %v407 = vlaneseq
        %v408 = vshrl.u32 %v407, 7
        %v409 = vsub.s32 0, %v408
        %v410 = vrot.slane %v403, %v409
        %v411 = vmul.f32 %v401, %v410
        %v412 = vlaneseq
        %v413 = vshrl.u32 %v412, 7
        %v414 = vsub.s32 0, %v413
        %v415 = vrot.slane %v404, %v414
        %v416 = vmul.f32 %v402, %v415
        %v417 = vadd.f32 %v411, %v416
        %vm418 = vcmask 261120
        %v419 = vsel %vm418, %v417, 0.0
        %420 = vadd.xlane.f32.xlu0 %v419
        %v421 = vpop.xlane.xlu0 %420
        %s422 = sld [smem:[#allocation8]]
        %v423 = vstv %s422
        %v424 = vadd.f32 %v421, %v423
        %v425 = vlaneseq
        %v426 = vshrl.u32 %v425, 7
        %v427 = vsub.s32 0, %v426
        %v428 = vrot.slane %v405, %v427
        %v429 = vmul.f32 %v401, %v428
        %v430 = vlaneseq
        %v431 = vshrl.u32 %v430, 7
        %v432 = vsub.s32 0, %v431
        %v433 = vrot.slane %v406, %v432
        %v434 = vmul.f32 %v402, %v433
        %v435 = vadd.f32 %v429, %v434
        %v436 = vsel %vm418, %v435, 0.0
        %437 = vadd.xlane.f32.xlu0 %v436
        %v438 = vpop.xlane.xlu0 %437
        %s439 = sld [smem:[#allocation8 + $0x1]]
        %v440 = vstv %s439
        %v441 = vadd.f32 %v438, %v440
        %v442 = vxor.u32 %v424, 2147483648
        %v443 = vmul.f32 %v442, 1.442695
        %v444 = vpow.pop %v443
        %v445 = vadd.f32 %v444, 1.0
        %v446 = vrcp.pop %v445
        %v447 = vmul.f32 1.0, %v446
        %v448 = vxor.u32 %v441, 2147483648
        %v449 = vmul.f32 %v448, 1.442695
        %v450 = vpow.pop %v449
        %v451 = vadd.f32 %v450, 1.0
        %v452 = vrcp.pop %v451
        %v453 = vmul.f32 1.0, %v452
        %v454 = vmul.f32 %v402, %v447
        %v455 = vld [vmem:[#allocation9] sm:$0xff]
        %v456 = vld [vmem:[#allocation9 + $0x8] sm:$0xff]
        %v457 = vld [vmem:[#allocation9 + $0x10] sm:$0xff]
        %v458 = vld [vmem:[#allocation9 + $0x18] sm:$0xff]
        %v459 = vld [vmem:[#allocation10] sm:$0xff]
        %v460 = vld [vmem:[#allocation10 + $0x8] sm:$0xff]
        %v461 = vld [vmem:[#allocation10 + $0x10] sm:$0xff]
        %v462 = vld [vmem:[#allocation10 + $0x18] sm:$0xff]
        %v464 = vsel %vm418, %v454, 0
        %466 = vmatprep.subr.mxu0 0.0
        %467 = vmatpush1.msra.mxu0 0.0
        %468 = vmatprep.subr.mxu0 0.0
        %469 = vmatpush1.msra.mxu0 0.0
        %470 = vmatprep.subr.mxu0 0.0
        %471 = vmatpush1.msra.mxu0 0.0
        %472 = vmatprep.subr.mxu0 0.0
        %473 = vmatpush1.msra.mxu0 0.0
        %474 = vmatprep.subr.mxu0 0.0
        %475 = vmatpush1.msra.mxu0 0.0
        %476 = vmatprep.subr.mxu0 0.0
        %477 = vmatpush1.msra.mxu0 0.0
        %478 = vmatprep.subr.mxu0 0.0
        %479 = vmatpush1.msra.mxu0 0.0
        %480 = vmatprep.subr.mxu0 0.0
        %481 = vmatpush1.msra.mxu0 0.0
        %482 = vmatprep.subr.mxu0 0.0
        %483 = vmatpush1.msra.mxu0 0.0
        %484 = vmatprep.subr.mxu0 0.0
        %485 = vmatpush1.msra.mxu0 0.0
        %486 = vmatprep.subr.mxu0 0.0
        %487 = vmatpush1.msra.mxu0 0.0
        %488 = vmatprep.subr.mxu0 0.0
        %489 = vmatpush1.msra.mxu0 0.0
        %490 = vmatprep.subr.mxu0 0.0
        %491 = vmatpush1.msra.mxu0 %v462
        %492 = vmatprep.subr.mxu0 0.0
        %493 = vmatpush1.msra.mxu0 %v461
        %494 = vmatprep.subr.mxu0 0.0
        %495 = vmatpush1.msra.mxu0 %v460
        %496 = vmatprep.subr.mxu0 0.0
        %497 = vmatpush1.msra.mxu0 %v459
        %498 = vmatprep.subr.mxu0 0.0
        %499 = vmatpush2.msra.mxu0 0.0
        %500 = vmatprep.subr.mxu0 0.0
        %501 = vmatpush2.msra.mxu0 0.0
        %502 = vmatprep.subr.mxu0 0.0
        %503 = vmatpush2.msra.mxu0 0.0
        %504 = vmatprep.subr.mxu0 0.0
        %505 = vmatpush2.msra.mxu0 0.0
        %506 = vmatprep.subr.mxu0 0.0
        %507 = vmatpush2.msra.mxu0 0.0
        %508 = vmatprep.subr.mxu0 0.0
        %509 = vmatpush2.msra.mxu0 0.0
        %510 = vmatprep.subr.mxu0 0.0
        %511 = vmatpush2.msra.mxu0 0.0
        %512 = vmatprep.subr.mxu0 0.0
        %513 = vmatpush2.msra.mxu0 0.0
        %514 = vmatprep.subr.mxu0 0.0
        %515 = vmatpush2.msra.mxu0 0.0
        %516 = vmatprep.subr.mxu0 0.0
        %517 = vmatpush2.msra.mxu0 0.0
        %518 = vmatprep.subr.mxu0 0.0
        %519 = vmatpush2.msra.mxu0 0.0
        %520 = vmatprep.subr.mxu0 0.0
        %521 = vmatpush2.msra.mxu0 0.0
        %522 = vmatprep.subr.mxu0 0.0
        %523 = vmatpush2.msra.mxu0 0.0
        %524 = vmatprep.subr.mxu0 0.0
        %525 = vmatpush2.msra.mxu0 0.0
        %526 = vmatprep.subr.mxu0 0.0
        %527 = vmatpush2.msra.mxu0 0.0
        %528 = vmatprep.subr.mxu0 0.0
        %529 = vmatpush2.msra.mxu0 0.0
        %530 = vmatprep.mubr.f32.mxu0 0.0
        %531 = vmatmul.mubr.f32.gmra.mxu0 %v464
        %v532 = vpop.f32.mrf.mxu0
        %v533 = vadd.f32 0.0, %v532
        %v534 = vpop.f32.mrf.mxu0
        %535 = vdwg.mxu0
        %v537 = vsel %vm418, %v401, 0
        %539 = vmatprep.subr.mxu0 0.0
        %540 = vmatpush1.msra.mxu0 0.0
        %541 = vmatprep.subr.mxu0 0.0
        %542 = vmatpush1.msra.mxu0 0.0
        %543 = vmatprep.subr.mxu0 0.0
        %544 = vmatpush1.msra.mxu0 0.0
        %545 = vmatprep.subr.mxu0 0.0
        %546 = vmatpush1.msra.mxu0 0.0
        %547 = vmatprep.subr.mxu0 0.0
        %548 = vmatpush1.msra.mxu0 0.0
        %549 = vmatprep.subr.mxu0 0.0
        %550 = vmatpush1.msra.mxu0 0.0
        %551 = vmatprep.subr.mxu0 0.0
        %552 = vmatpush1.msra.mxu0 0.0
        %553 = vmatprep.subr.mxu0 0.0
        %554 = vmatpush1.msra.mxu0 0.0
        %555 = vmatprep.subr.mxu0 0.0
        %556 = vmatpush1.msra.mxu0 0.0
        %557 = vmatprep.subr.mxu0 0.0
        %558 = vmatpush1.msra.mxu0 0.0
        %559 = vmatprep.subr.mxu0 0.0
        %560 = vmatpush1.msra.mxu0 0.0
        %561 = vmatprep.subr.mxu0 0.0
        %562 = vmatpush1.msra.mxu0 0.0
        %563 = vmatprep.subr.mxu0 0.0
        %564 = vmatpush1.msra.mxu0 %v458
        %565 = vmatprep.subr.mxu0 0.0
        %566 = vmatpush1.msra.mxu0 %v457
        %567 = vmatprep.subr.mxu0 0.0
        %568 = vmatpush1.msra.mxu0 %v456
        %569 = vmatprep.subr.mxu0 0.0
        %570 = vmatpush1.msra.mxu0 %v455
        %571 = vmatprep.subr.mxu0 0.0
        %572 = vmatpush2.msra.mxu0 0.0
        %573 = vmatprep.subr.mxu0 0.0
        %574 = vmatpush2.msra.mxu0 0.0
        %575 = vmatprep.subr.mxu0 0.0
        %576 = vmatpush2.msra.mxu0 0.0
        %577 = vmatprep.subr.mxu0 0.0
        %578 = vmatpush2.msra.mxu0 0.0
        %579 = vmatprep.subr.mxu0 0.0
        %580 = vmatpush2.msra.mxu0 0.0
        %581 = vmatprep.subr.mxu0 0.0
        %582 = vmatpush2.msra.mxu0 0.0
        %583 = vmatprep.subr.mxu0 0.0
        %584 = vmatpush2.msra.mxu0 0.0
        %585 = vmatprep.subr.mxu0 0.0
        %586 = vmatpush2.msra.mxu0 0.0
        %587 = vmatprep.subr.mxu0 0.0
        %588 = vmatpush2.msra.mxu0 0.0
        %589 = vmatprep.subr.mxu0 0.0
        %590 = vmatpush2.msra.mxu0 0.0
        %591 = vmatprep.subr.mxu0 0.0
        %592 = vmatpush2.msra.mxu0 0.0
        %593 = vmatprep.subr.mxu0 0.0
        %594 = vmatpush2.msra.mxu0 0.0
        %595 = vmatprep.subr.mxu0 0.0
        %596 = vmatpush2.msra.mxu0 0.0
        %597 = vmatprep.subr.mxu0 0.0
        %598 = vmatpush2.msra.mxu0 0.0
        %599 = vmatprep.subr.mxu0 0.0
        %600 = vmatpush2.msra.mxu0 0.0
        %601 = vmatprep.subr.mxu0 0.0
        %602 = vmatpush2.msra.mxu0 0.0
        %603 = vmatprep.mubr.f32.mxu0 0.0
        %604 = vmatmul.mubr.f32.gmra.mxu0 %v537
        %v605 = vpop.f32.mrf.mxu0
        %v606 = vadd.f32 %v533, %v605
        %v607 = vpop.f32.mrf.mxu0
        %608 = vdwg.mxu0
        %v609 = vld [vmem:[%s7] sm:$0x1]
        %v611 = vlaneseq
        %v612 = vshrl.u32 %v611, 7
        %v613 = vsub.s32 0, %v612
        %v614 = vrot.slane %v609, %v613
        %v616 = vadd.f32 %v606, %v614
        %v617 = vsub.f32 %v616, %v402
        %v618 = vmul.f32 %v453, %v617
        %v619 = vadd.f32 %v402, %v618
        %620 = vst.msk [vmem:[%s400] sm:$0xff] %vm418, %v619
        %s621 = sand.u32 %s216, 1
        %s622 = scalar_lea.sflag [#allocation4], %s621
        %s623 = sand.u32 %s216, 1
        %s624 = smul.addr %s623, 8
        %s625 = scalar_lea.vmem [#allocation12], %s624
        // Predicated region
        $region73: #{_gate_call.1} parent=51 // pred_check
          %p626 = pneg %p226
        $region74: #{_gate_call.1} parent=51 // pred_check_branch
          %628 = sbr.rel (%p626) target = $region76
        $region75: #{_gate_call.1} parent=51 // pred_region
          %s630 = ssub.s32 128, 128
          %631 = vsyncadd %s622, %s630
          %s632 = smul.addr %s30, 128
          %s633 = scalar_lea.hbm %s8, %s632
          %s635 = sshll.u32 %s625, 4
          %s636 = int_to_ptr.vmem [resolvable:$true] %s635
          %638 = dma.vmem_to_hbm [thread:$0]  %s636, 128, %s633, %s622
        $region76: #{_gate_call.1} parent=51 // pred_fallthru
          _
      $region52: #{_gate_call.1} parent=5 // pred_fallthru
        _
      %p639 = scmp.le.s32.totalorder 2, %s25
      // Predicated region
      $region77: #{_gate_call.1} parent=5 // pred_check
        %p640 = pneg %p639
      $region78: #{_gate_call.1} parent=5 // pred_check_branch
        %642 = sbr.rel (%p640) target = $region80
      $region79: #{_gate_call.1} parent=5 // pred_region
        %s643 = ssub.s32 %s25, 2
        // Predicated region
        $region81: #{_gate_call.1} parent=79 // pred_check
          %p644 = pneg %p232
        $region82: #{_gate_call.1} parent=79 // pred_check_branch
          %646 = sbr.rel (%p644) target = $region84
        $region83: #{_gate_call.1} parent=79 // pred_region
          %s647 = sand.u32 %s217, 1
          %s648 = scalar_lea.sflag [#allocation4], %s647
          %s649 = sand.u32 %s217, 1
          %s650 = smul.addr %s649, 8
          %s651 = scalar_lea.vmem [#allocation12], %s650
          %652 = dma.done %s648, 128
        $region84: #{_gate_call.1} parent=79 // pred_fallthru
          _
      $region80: #{_gate_call.1} parent=5 // pred_fallthru
        _
    $region6: #{_gate_call.1} parent=1 // loop_footer
      %s29 = sadd.s32 1, %s25
    $region7: #{_gate_call.1} parent=1 // loop_footer_branch
      %24 = sbr.rel target = $region3
    $region8: #{_gate_call.1} parent=1 // loop_exit
      _
    %653 = vsyncpa [#allocation3], 1
    %s654 = scalar_lea.sflag [#allocation3], 1
    %655 = vsyncpa %s654, 1
    %656 = vsyncpa [#allocation7], 1
    %s657 = scalar_lea.sflag [#allocation7], 1
    %658 = vsyncpa %s657, 1
    %659 = vsyncpa [#allocation11], 1
    %660 = vsyncpa [#allocation4], 1
    %s661 = scalar_lea.sflag [#allocation4], 1
    %662 = vsyncpa %s661, 1
    %663 = vsyncpa [#allocation5], 1
    %s664 = scalar_lea.sflag [#allocation5], 1
    %665 = vsyncpa %s664, 1

</llo_original>
